<compile_context>
chip_gen: v6e
topology: v6e:2x2x1
jax: 0.10.0
libtpu: 0.0.40
codegen_flags: <defaults>
</compile_context>

<pallas_src>
import functools

import jax
import jax.numpy as jnp
from jax.experimental import pallas as pl
from jax.experimental.pallas import tpu as pltpu


def _gat_model_kernel(x_ref, negb_ref, *refs, heads, num_layers):
    """All GATConv layers fused. refs = (w_comb, bias) * L, out_ref.

    x_ref     : [N, F_in0]           node features (f32)
    negb_ref  : [N, N]   (bf16)      additive mask: 0 where edge j->i exists, ~-1e30 else
                                     (self-loops guaranteed by the wrapper, so every row
                                      has at least one unmasked entry)
    w_comb_l  : [F_in, PAD(H*C+2H)]  [per-head weights | W@a_dst | W@a_src], zero padded
    bias_l    : [1, C]
    out_ref   : [N, OUT_PAD]         lane-dense padded output slab
    """
    out_ref = refs[-1]
    layer_refs = refs[:-1]

    x = x_ref[...].astype(jnp.float32)
    neg_bias = negb_ref[...].astype(jnp.float32)        # cast once; mask reused L*H times
    n = x.shape[0]
    inv_h = 1.0 / heads

    for li in range(num_layers):
        w_ref, bias_ref = layer_refs[2 * li:2 * li + 2]
        c = bias_ref.shape[1]
        hc = heads * c

        # ONE MXU matmul per layer: features for all heads + both logit projections.
        z = jnp.dot(x, w_ref[...], preferred_element_type=jnp.float32)  # [N, PAD]
        feat_bf = z[:, :hc].astype(jnp.bfloat16)                        # [N, H*C]
        a_d = z[:, hc:hc + heads]                                       # [N, H]
        a_s_t = z[:, hc + heads:hc + 2 * heads].T                       # [H, N]

        acc = jnp.zeros((n, c), jnp.float32)
        for h in range(heads):
            # e[i, j] = a_dst[i, h] + a_src[j, h]  for edge j -> i
            e = a_d[:, h:h + 1] + a_s_t[h:h + 1, :]                     # [N, N]
            e = jnp.maximum(e, 0.2 * e)                                 # LeakyReLU(0.2)
            e = e + neg_bias                                            # mask non-edges
            e = e - jnp.max(e, axis=-1, keepdims=True)
            p = jnp.exp(e)                                              # unnormalized probs
            rowsum = jnp.sum(p, axis=-1, keepdims=True)                 # [N, 1]
            # aggregation on the MXU in bf16, f32 accumulation
            partial = jnp.dot(p.astype(jnp.bfloat16),
                              feat_bf[:, h * c:(h + 1) * c],
                              preferred_element_type=jnp.float32)       # [N, C]
            # deferred softmax normalization + head-mean folded into one scale (EUP recip)
            acc = acc + partial * (pl.reciprocal(rowsum, approx=True) * inv_h)

        # concat=False head mean already applied via inv_h; bias + F.relu fused
        x = jnp.maximum(acc + bias_ref[...], 0.0)                       # [N, C]

    # lane-dense store: pad last dim up to the slab width
    pad = out_ref.shape[1] - x.shape[1]
    if pad > 0:
        x = jnp.concatenate([x, jnp.zeros((n, pad), jnp.float32)], axis=1)
    out_ref[...] = x


def gat_model_forward(x, adj, params, heads):
    """Run the whole GAT stack in one Pallas kernel invocation."""
    n = x.shape[0]
    num_layers = len(params)
    out_dim = params[-1][0].shape[2]
    out_pad = 128 * (-(-out_dim // 128))  # round up to full lane width

    # additive softmax mask, computed once (adj already contains self-loops); bf16 to
    # halve the only O(N^2) HBM input / VMEM-resident array.
    neg_bias = jnp.where(adj > 0.0, 0.0, -1e30).astype(jnp.bfloat16)

    flat_refs = []
    max_width = 0
    for (w, a_src, a_dst, bias) in params:
        h_, f_in, c = w.shape
        # head-batched weight: [F_in, H*C]
        w_all = jnp.transpose(w, (1, 0, 2)).reshape(f_in, h_ * c)
        # fold attention vectors into the weights: [F_in, H]
        wa_src = jnp.einsum("hfc,hc->fh", w, a_src)
        wa_dst = jnp.einsum("hfc,hc->fh", w, a_dst)
        # single combined matrix [W_all | W@a_dst | W@a_src], zero-padded to 128 lanes
        w_comb = jnp.concatenate([w_all, wa_dst, wa_src], axis=1)
        width = w_comb.shape[1]
        pad_w = 128 * (-(-width // 128)) - width
        if pad_w > 0:
            w_comb = jnp.concatenate(
                [w_comb, jnp.zeros((f_in, pad_w), jnp.float32)], axis=1)
        max_width = max(max_width, w_comb.shape[1])
        flat_refs += [w_comb, bias]

    # VMEM budget: bf16 mask + a handful of [N,N] f32 temporaries + weights + I/O,
    # 2x headroom, clamped to 64 MiB so it is valid on v7x as well.
    est = (2 * n * n                        # bf16 mask
           + 5 * 4 * n * n                  # in-kernel [N,N] f32 temporaries
           + 4 * x.size                     # input features
           + 4 * n * out_pad                # output slab
           + 4 * n * max_width              # z = x @ W_comb
           + sum(int(a.size) * a.dtype.itemsize for a in flat_refs))
    vmem_limit = int(min(64 << 20, max(2 * est, 32 << 20)))

    kernel = functools.partial(_gat_model_kernel, heads=heads,
                               num_layers=num_layers)
    out = pl.pallas_call(
        kernel,
        out_shape=jax.ShapeDtypeStruct((n, out_pad), jnp.float32),
        in_specs=[pl.BlockSpec(memory_space=pltpu.MemorySpace.VMEM)]
                 * (2 + len(flat_refs)),
        out_specs=pl.BlockSpec(memory_space=pltpu.MemorySpace.VMEM),
        compiler_params=pltpu.CompilerParams(vmem_limit_bytes=vmem_limit),
    )(x, neg_bias, *flat_refs)
    return out[:, :out_dim]


def init_gat_params(key, num_layers, input_dim, hidden_dim, output_dim, heads):
    """Deterministic glorot-style init, shapes match GATConv(concat=False)."""
    dims_in = [input_dim] + [hidden_dim] * (num_layers - 1)
    dims_out = [hidden_dim] * (num_layers - 1) + [output_dim]
    params = []
    for li, (f_in, f_out) in enumerate(zip(dims_in, dims_out)):
        k_w, k_s, k_d, key = jax.random.split(jax.random.fold_in(key, li), 4)
        scale_w = (2.0 / (f_in + f_out)) ** 0.5
        scale_a = (2.0 / (1 + f_out)) ** 0.5
        w = scale_w * jax.random.normal(k_w, (heads, f_in, f_out), jnp.float32)
        a_src = scale_a * jax.random.normal(k_s, (heads, f_out), jnp.float32)
        a_dst = scale_a * jax.random.normal(k_d, (heads, f_out), jnp.float32)
        bias = jnp.zeros((1, f_out), jnp.float32)
        params.append((w, a_src, a_dst, bias))
    return params


if __name__ == "__main__":
    num_layers, input_dim, hidden_dim, output_dim, heads = 3, 8, 32, 16, 4
    num_nodes = 16

    key = jax.random.PRNGKey(0)
    k_x, k_p = jax.random.split(key)

    # node features (data.x)
    x = jax.random.normal(k_x, (num_nodes, input_dim), jnp.float32)

    # deterministic edge_index (data.edge_index): bidirectional ring graph, [2, 2N]
    src = jnp.arange(num_nodes, dtype=jnp.int32)
    dst = (src + 1) % num_nodes
    edge_index = jnp.concatenate(
        [jnp.stack([src, dst], axis=0), jnp.stack([dst, src], axis=0)], axis=1)

    # densify to adjacency mask adj[i, j] = 1 iff edge j -> i ; add self-loops
    # (GATConv default add_self_loops=True -> every softmax row is non-empty).
    adj = jnp.zeros((num_nodes, num_nodes), jnp.float32)
    adj = adj.at[edge_index[1], edge_index[0]].set(1.0)
    adj = adj.at[jnp.arange(num_nodes), jnp.arange(num_nodes)].set(1.0)

    # data.batch is unused by GATModel.forward -> not needed.
    # TODO(synk): GATConv's internal attention dropout is 0.0 here (module never
    # forwards its dropout arg), so no dropout op is emitted.

    params = init_gat_params(k_p, num_layers, input_dim, hidden_dim, output_dim, heads)

    out = gat_model_forward(x, adj, params, heads)
    jax.block_until_ready(out)
    assert out.shape == (num_nodes, output_dim)
    print("KERNEL_OK")
</pallas_src>

<mosaic_0001>
module attributes {stable_mosaic.version = 11 : i64} {
  func.func @_gat_model_kernel(%arg0: memref<16x8xf32, #tpu.memory_space<vmem>>, %arg1: memref<16x16xbf16, #tpu.memory_space<vmem>>, %arg2: memref<8x256xf32, #tpu.memory_space<vmem>>, %arg3: memref<1x32xf32, #tpu.memory_space<vmem>>, %arg4: memref<32x256xf32, #tpu.memory_space<vmem>>, %arg5: memref<1x32xf32, #tpu.memory_space<vmem>>, %arg6: memref<32x128xf32, #tpu.memory_space<vmem>>, %arg7: memref<1x16xf32, #tpu.memory_space<vmem>>, %arg8: memref<16x128xf32, #tpu.memory_space<vmem>>) attributes {dimension_semantics = [], scalar_prefetch = 0 : i64, scratch_operands = 0 : i64, tpu.core_type = #tpu.core_type<tc>} {
    %c0 = arith.constant 0 : index
    %c0_0 = arith.constant 0 : index
    %0 = vector.load %arg0[%c0, %c0_0] : memref<16x8xf32, #tpu.memory_space<vmem>>, vector<16x8xf32>
    %c0_1 = arith.constant 0 : index
    %c0_2 = arith.constant 0 : index
    %1 = vector.load %arg1[%c0_1, %c0_2] : memref<16x16xbf16, #tpu.memory_space<vmem>>, vector<16x16xbf16>
    %2 = arith.extf %1 : vector<16x16xbf16> to vector<16x16xf32>
    %c0_3 = arith.constant 0 : index
    %c0_4 = arith.constant 0 : index
    %3 = vector.load %arg2[%c0_3, %c0_4] : memref<8x256xf32, #tpu.memory_space<vmem>>, vector<8x256xf32>
    %cst = arith.constant dense<0.000000e+00> : vector<16x256xf32>
    %4 = tpu.matmul %0, %3, %cst {dimension_numbers = #tpu.dot_dimension_numbers<[1], [0], [0], [1], [0, 0, 1, 1], [], []>} : vector<16x8xf32>, vector<8x256xf32>, vector<16x256xf32> -> vector<16x256xf32>
    %5 = vector.extract_strided_slice %4 {offsets = [0, 0], sizes = [16, 128], strides = [1, 1]} : vector<16x256xf32> to vector<16x128xf32>
    %6 = arith.truncf %5 : vector<16x128xf32> to vector<16x128xbf16>
    %7 = vector.extract_strided_slice %4 {offsets = [0, 128], sizes = [16, 4], strides = [1, 1]} : vector<16x256xf32> to vector<16x4xf32>
    %8 = vector.extract_strided_slice %4 {offsets = [0, 132], sizes = [16, 4], strides = [1, 1]} : vector<16x256xf32> to vector<16x4xf32>
    %9 = tpu.transpose %8, [1, 0] : vector<16x4xf32> -> vector<4x16xf32>
    %cst_5 = arith.constant 0.000000e+00 : f32
    %10 = vector.broadcast %cst_5 : f32 to vector<16x32xf32>
    %11 = vector.extract_strided_slice %7 {offsets = [0, 0], sizes = [16, 1], strides = [1, 1]} : vector<16x4xf32> to vector<16x1xf32>
    %12 = vector.extract_strided_slice %9 {offsets = [0, 0], sizes = [1, 16], strides = [1, 1]} : vector<4x16xf32> to vector<1x16xf32>
    %13 = vector.broadcast %11 : vector<16x1xf32> to vector<16x16xf32>
    %14 = vector.broadcast %12 : vector<1x16xf32> to vector<16x16xf32>
    %15 = arith.addf %13, %14 : vector<16x16xf32>
    %cst_6 = arith.constant 2.000000e-01 : f32
    %16 = vector.broadcast %cst_6 : f32 to vector<16x16xf32>
    %17 = arith.mulf %16, %15 : vector<16x16xf32>
    %18 = arith.maximumf %15, %17 : vector<16x16xf32>
    %19 = arith.addf %18, %2 : vector<16x16xf32>
    %cst_7 = arith.constant dense<0xFF800000> : vector<16xf32>
    %20 = vector.multi_reduction <maximumf>, %19, %cst_7 [1] : vector<16x16xf32> to vector<16xf32>
    %21 = vector.shape_cast %20 : vector<16xf32> to vector<16x1xf32>
    %22 = vector.broadcast %21 : vector<16x1xf32> to vector<16x16xf32>
    %23 = arith.subf %19, %22 : vector<16x16xf32>
    %24 = math.exp %23 : vector<16x16xf32>
    %cst_8 = arith.constant dense<0.000000e+00> : vector<16xf32>
    %25 = vector.multi_reduction <add>, %24, %cst_8 [1] : vector<16x16xf32> to vector<16xf32>
    %26 = vector.shape_cast %25 : vector<16xf32> to vector<16x1xf32>
    %27 = arith.truncf %24 : vector<16x16xf32> to vector<16x16xbf16>
    %28 = vector.extract_strided_slice %6 {offsets = [0, 0], sizes = [16, 32], strides = [1, 1]} : vector<16x128xbf16> to vector<16x32xbf16>
    %cst_9 = arith.constant dense<0.000000e+00> : vector<16x32xf32>
    %29 = tpu.matmul %27, %28, %cst_9 {dimension_numbers = #tpu.dot_dimension_numbers<[1], [0], [0], [1], [0, 0, 1, 1], [], []>} : vector<16x16xbf16>, vector<16x32xbf16>, vector<16x32xf32> -> vector<16x32xf32>
    %30 = tpu.reciprocal %26 {approx = true} : vector<16x1xf32> -> vector<16x1xf32>
    %cst_10 = arith.constant 2.500000e-01 : f32
    %31 = vector.broadcast %cst_10 : f32 to vector<16x1xf32>
    %32 = arith.mulf %30, %31 : vector<16x1xf32>
    %33 = vector.broadcast %32 : vector<16x1xf32> to vector<16x32xf32>
    %34 = arith.mulf %29, %33 : vector<16x32xf32>
    %35 = arith.addf %10, %34 : vector<16x32xf32>
    %36 = vector.extract_strided_slice %7 {offsets = [0, 1], sizes = [16, 1], strides = [1, 1]} : vector<16x4xf32> to vector<16x1xf32>
    %37 = vector.extract_strided_slice %9 {offsets = [1, 0], sizes = [1, 16], strides = [1, 1]} : vector<4x16xf32> to vector<1x16xf32>
    %38 = vector.broadcast %36 : vector<16x1xf32> to vector<16x16xf32>
    %39 = vector.broadcast %37 : vector<1x16xf32> to vector<16x16xf32>
    %40 = arith.addf %38, %39 : vector<16x16xf32>
    %cst_11 = arith.constant 2.000000e-01 : f32
    %41 = vector.broadcast %cst_11 : f32 to vector<16x16xf32>
    %42 = arith.mulf %41, %40 : vector<16x16xf32>
    %43 = arith.maximumf %40, %42 : vector<16x16xf32>
    %44 = arith.addf %43, %2 : vector<16x16xf32>
    %cst_12 = arith.constant dense<0xFF800000> : vector<16xf32>
    %45 = vector.multi_reduction <maximumf>, %44, %cst_12 [1] : vector<16x16xf32> to vector<16xf32>
    %46 = vector.shape_cast %45 : vector<16xf32> to vector<16x1xf32>
    %47 = vector.broadcast %46 : vector<16x1xf32> to vector<16x16xf32>
    %48 = arith.subf %44, %47 : vector<16x16xf32>
    %49 = math.exp %48 : vector<16x16xf32>
    %cst_13 = arith.constant dense<0.000000e+00> : vector<16xf32>
    %50 = vector.multi_reduction <add>, %49, %cst_13 [1] : vector<16x16xf32> to vector<16xf32>
    %51 = vector.shape_cast %50 : vector<16xf32> to vector<16x1xf32>
    %52 = arith.truncf %49 : vector<16x16xf32> to vector<16x16xbf16>
    %53 = vector.extract_strided_slice %6 {offsets = [0, 32], sizes = [16, 32], strides = [1, 1]} : vector<16x128xbf16> to vector<16x32xbf16>
    %cst_14 = arith.constant dense<0.000000e+00> : vector<16x32xf32>
    %54 = tpu.matmul %52, %53, %cst_14 {dimension_numbers = #tpu.dot_dimension_numbers<[1], [0], [0], [1], [0, 0, 1, 1], [], []>} : vector<16x16xbf16>, vector<16x32xbf16>, vector<16x32xf32> -> vector<16x32xf32>
    %55 = tpu.reciprocal %51 {approx = true} : vector<16x1xf32> -> vector<16x1xf32>
    %cst_15 = arith.constant 2.500000e-01 : f32
    %56 = vector.broadcast %cst_15 : f32 to vector<16x1xf32>
    %57 = arith.mulf %55, %56 : vector<16x1xf32>
    %58 = vector.broadcast %57 : vector<16x1xf32> to vector<16x32xf32>
    %59 = arith.mulf %54, %58 : vector<16x32xf32>
    %60 = arith.addf %35, %59 : vector<16x32xf32>
    %61 = vector.extract_strided_slice %7 {offsets = [0, 2], sizes = [16, 1], strides = [1, 1]} : vector<16x4xf32> to vector<16x1xf32>
    %62 = vector.extract_strided_slice %9 {offsets = [2, 0], sizes = [1, 16], strides = [1, 1]} : vector<4x16xf32> to vector<1x16xf32>
    %63 = vector.broadcast %61 : vector<16x1xf32> to vector<16x16xf32>
    %64 = vector.broadcast %62 : vector<1x16xf32> to vector<16x16xf32>
    %65 = arith.addf %63, %64 : vector<16x16xf32>
    %cst_16 = arith.constant 2.000000e-01 : f32
    %66 = vector.broadcast %cst_16 : f32 to vector<16x16xf32>
    %67 = arith.mulf %66, %65 : vector<16x16xf32>
    %68 = arith.maximumf %65, %67 : vector<16x16xf32>
    %69 = arith.addf %68, %2 : vector<16x16xf32>
    %cst_17 = arith.constant dense<0xFF800000> : vector<16xf32>
    %70 = vector.multi_reduction <maximumf>, %69, %cst_17 [1] : vector<16x16xf32> to vector<16xf32>
    %71 = vector.shape_cast %70 : vector<16xf32> to vector<16x1xf32>
    %72 = vector.broadcast %71 : vector<16x1xf32> to vector<16x16xf32>
    %73 = arith.subf %69, %72 : vector<16x16xf32>
    %74 = math.exp %73 : vector<16x16xf32>
    %cst_18 = arith.constant dense<0.000000e+00> : vector<16xf32>
    %75 = vector.multi_reduction <add>, %74, %cst_18 [1] : vector<16x16xf32> to vector<16xf32>
    %76 = vector.shape_cast %75 : vector<16xf32> to vector<16x1xf32>
    %77 = arith.truncf %74 : vector<16x16xf32> to vector<16x16xbf16>
    %78 = vector.extract_strided_slice %6 {offsets = [0, 64], sizes = [16, 32], strides = [1, 1]} : vector<16x128xbf16> to vector<16x32xbf16>
    %cst_19 = arith.constant dense<0.000000e+00> : vector<16x32xf32>
    %79 = tpu.matmul %77, %78, %cst_19 {dimension_numbers = #tpu.dot_dimension_numbers<[1], [0], [0], [1], [0, 0, 1, 1], [], []>} : vector<16x16xbf16>, vector<16x32xbf16>, vector<16x32xf32> -> vector<16x32xf32>
    %80 = tpu.reciprocal %76 {approx = true} : vector<16x1xf32> -> vector<16x1xf32>
    %cst_20 = arith.constant 2.500000e-01 : f32
    %81 = vector.broadcast %cst_20 : f32 to vector<16x1xf32>
    %82 = arith.mulf %80, %81 : vector<16x1xf32>
    %83 = vector.broadcast %82 : vector<16x1xf32> to vector<16x32xf32>
    %84 = arith.mulf %79, %83 : vector<16x32xf32>
    %85 = arith.addf %60, %84 : vector<16x32xf32>
    %86 = vector.extract_strided_slice %7 {offsets = [0, 3], sizes = [16, 1], strides = [1, 1]} : vector<16x4xf32> to vector<16x1xf32>
    %87 = vector.extract_strided_slice %9 {offsets = [3, 0], sizes = [1, 16], strides = [1, 1]} : vector<4x16xf32> to vector<1x16xf32>
    %88 = vector.broadcast %86 : vector<16x1xf32> to vector<16x16xf32>
    %89 = vector.broadcast %87 : vector<1x16xf32> to vector<16x16xf32>
    %90 = arith.addf %88, %89 : vector<16x16xf32>
    %cst_21 = arith.constant 2.000000e-01 : f32
    %91 = vector.broadcast %cst_21 : f32 to vector<16x16xf32>
    %92 = arith.mulf %91, %90 : vector<16x16xf32>
    %93 = arith.maximumf %90, %92 : vector<16x16xf32>
    %94 = arith.addf %93, %2 : vector<16x16xf32>
    %cst_22 = arith.constant dense<0xFF800000> : vector<16xf32>
    %95 = vector.multi_reduction <maximumf>, %94, %cst_22 [1] : vector<16x16xf32> to vector<16xf32>
    %96 = vector.shape_cast %95 : vector<16xf32> to vector<16x1xf32>
    %97 = vector.broadcast %96 : vector<16x1xf32> to vector<16x16xf32>
    %98 = arith.subf %94, %97 : vector<16x16xf32>
    %99 = math.exp %98 : vector<16x16xf32>
    %cst_23 = arith.constant dense<0.000000e+00> : vector<16xf32>
    %100 = vector.multi_reduction <add>, %99, %cst_23 [1] : vector<16x16xf32> to vector<16xf32>
    %101 = vector.shape_cast %100 : vector<16xf32> to vector<16x1xf32>
    %102 = arith.truncf %99 : vector<16x16xf32> to vector<16x16xbf16>
    %103 = vector.extract_strided_slice %6 {offsets = [0, 96], sizes = [16, 32], strides = [1, 1]} : vector<16x128xbf16> to vector<16x32xbf16>
    %cst_24 = arith.constant dense<0.000000e+00> : vector<16x32xf32>
    %104 = tpu.matmul %102, %103, %cst_24 {dimension_numbers = #tpu.dot_dimension_numbers<[1], [0], [0], [1], [0, 0, 1, 1], [], []>} : vector<16x16xbf16>, vector<16x32xbf16>, vector<16x32xf32> -> vector<16x32xf32>
    %105 = tpu.reciprocal %101 {approx = true} : vector<16x1xf32> -> vector<16x1xf32>
    %cst_25 = arith.constant 2.500000e-01 : f32
    %106 = vector.broadcast %cst_25 : f32 to vector<16x1xf32>
    %107 = arith.mulf %105, %106 : vector<16x1xf32>
    %108 = vector.broadcast %107 : vector<16x1xf32> to vector<16x32xf32>
    %109 = arith.mulf %104, %108 : vector<16x32xf32>
    %110 = arith.addf %85, %109 : vector<16x32xf32>
    %c0_26 = arith.constant 0 : index
    %c0_27 = arith.constant 0 : index
    %111 = vector.load %arg3[%c0_26, %c0_27] : memref<1x32xf32, #tpu.memory_space<vmem>>, vector<1x32xf32>
    %112 = vector.broadcast %111 : vector<1x32xf32> to vector<16x32xf32>
    %113 = arith.addf %110, %112 : vector<16x32xf32>
    %cst_28 = arith.constant 0.000000e+00 : f32
    %114 = vector.broadcast %cst_28 : f32 to vector<16x32xf32>
    %115 = arith.maximumf %113, %114 : vector<16x32xf32>
    %c0_29 = arith.constant 0 : index
    %c0_30 = arith.constant 0 : index
    %116 = vector.load %arg4[%c0_29, %c0_30] : memref<32x256xf32, #tpu.memory_space<vmem>>, vector<32x256xf32>
    %cst_31 = arith.constant dense<0.000000e+00> : vector<16x256xf32>
    %117 = tpu.matmul %115, %116, %cst_31 {dimension_numbers = #tpu.dot_dimension_numbers<[1], [0], [0], [1], [0, 0, 1, 1], [], []>} : vector<16x32xf32>, vector<32x256xf32>, vector<16x256xf32> -> vector<16x256xf32>
    %118 = vector.extract_strided_slice %117 {offsets = [0, 0], sizes = [16, 128], strides = [1, 1]} : vector<16x256xf32> to vector<16x128xf32>
    %119 = arith.truncf %118 : vector<16x128xf32> to vector<16x128xbf16>
    %120 = vector.extract_strided_slice %117 {offsets = [0, 128], sizes = [16, 4], strides = [1, 1]} : vector<16x256xf32> to vector<16x4xf32>
    %121 = vector.extract_strided_slice %117 {offsets = [0, 132], sizes = [16, 4], strides = [1, 1]} : vector<16x256xf32> to vector<16x4xf32>
    %122 = tpu.transpose %121, [1, 0] : vector<16x4xf32> -> vector<4x16xf32>
    %cst_32 = arith.constant 0.000000e+00 : f32
    %123 = vector.broadcast %cst_32 : f32 to vector<16x32xf32>
    %124 = vector.extract_strided_slice %120 {offsets = [0, 0], sizes = [16, 1], strides = [1, 1]} : vector<16x4xf32> to vector<16x1xf32>
    %125 = vector.extract_strided_slice %122 {offsets = [0, 0], sizes = [1, 16], strides = [1, 1]} : vector<4x16xf32> to vector<1x16xf32>
    %126 = vector.broadcast %124 : vector<16x1xf32> to vector<16x16xf32>
    %127 = vector.broadcast %125 : vector<1x16xf32> to vector<16x16xf32>
    %128 = arith.addf %126, %127 : vector<16x16xf32>
    %cst_33 = arith.constant 2.000000e-01 : f32
    %129 = vector.broadcast %cst_33 : f32 to vector<16x16xf32>
    %130 = arith.mulf %129, %128 : vector<16x16xf32>
    %131 = arith.maximumf %128, %130 : vector<16x16xf32>
    %132 = arith.addf %131, %2 : vector<16x16xf32>
    %cst_34 = arith.constant dense<0xFF800000> : vector<16xf32>
    %133 = vector.multi_reduction <maximumf>, %132, %cst_34 [1] : vector<16x16xf32> to vector<16xf32>
    %134 = vector.shape_cast %133 : vector<16xf32> to vector<16x1xf32>
    %135 = vector.broadcast %134 : vector<16x1xf32> to vector<16x16xf32>
    %136 = arith.subf %132, %135 : vector<16x16xf32>
    %137 = math.exp %136 : vector<16x16xf32>
    %cst_35 = arith.constant dense<0.000000e+00> : vector<16xf32>
    %138 = vector.multi_reduction <add>, %137, %cst_35 [1] : vector<16x16xf32> to vector<16xf32>
    %139 = vector.shape_cast %138 : vector<16xf32> to vector<16x1xf32>
    %140 = arith.truncf %137 : vector<16x16xf32> to vector<16x16xbf16>
    %141 = vector.extract_strided_slice %119 {offsets = [0, 0], sizes = [16, 32], strides = [1, 1]} : vector<16x128xbf16> to vector<16x32xbf16>
    %cst_36 = arith.constant dense<0.000000e+00> : vector<16x32xf32>
    %142 = tpu.matmul %140, %141, %cst_36 {dimension_numbers = #tpu.dot_dimension_numbers<[1], [0], [0], [1], [0, 0, 1, 1], [], []>} : vector<16x16xbf16>, vector<16x32xbf16>, vector<16x32xf32> -> vector<16x32xf32>
    %143 = tpu.reciprocal %139 {approx = true} : vector<16x1xf32> -> vector<16x1xf32>
    %cst_37 = arith.constant 2.500000e-01 : f32
    %144 = vector.broadcast %cst_37 : f32 to vector<16x1xf32>
    %145 = arith.mulf %143, %144 : vector<16x1xf32>
    %146 = vector.broadcast %145 : vector<16x1xf32> to vector<16x32xf32>
    %147 = arith.mulf %142, %146 : vector<16x32xf32>
    %148 = arith.addf %123, %147 : vector<16x32xf32>
    %149 = vector.extract_strided_slice %120 {offsets = [0, 1], sizes = [16, 1], strides = [1, 1]} : vector<16x4xf32> to vector<16x1xf32>
    %150 = vector.extract_strided_slice %122 {offsets = [1, 0], sizes = [1, 16], strides = [1, 1]} : vector<4x16xf32> to vector<1x16xf32>
    %151 = vector.broadcast %149 : vector<16x1xf32> to vector<16x16xf32>
    %152 = vector.broadcast %150 : vector<1x16xf32> to vector<16x16xf32>
    %153 = arith.addf %151, %152 : vector<16x16xf32>
    %cst_38 = arith.constant 2.000000e-01 : f32
    %154 = vector.broadcast %cst_38 : f32 to vector<16x16xf32>
    %155 = arith.mulf %154, %153 : vector<16x16xf32>
    %156 = arith.maximumf %153, %155 : vector<16x16xf32>
    %157 = arith.addf %156, %2 : vector<16x16xf32>
    %cst_39 = arith.constant dense<0xFF800000> : vector<16xf32>
    %158 = vector.multi_reduction <maximumf>, %157, %cst_39 [1] : vector<16x16xf32> to vector<16xf32>
    %159 = vector.shape_cast %158 : vector<16xf32> to vector<16x1xf32>
    %160 = vector.broadcast %159 : vector<16x1xf32> to vector<16x16xf32>
    %161 = arith.subf %157, %160 : vector<16x16xf32>
    %162 = math.exp %161 : vector<16x16xf32>
    %cst_40 = arith.constant dense<0.000000e+00> : vector<16xf32>
    %163 = vector.multi_reduction <add>, %162, %cst_40 [1] : vector<16x16xf32> to vector<16xf32>
    %164 = vector.shape_cast %163 : vector<16xf32> to vector<16x1xf32>
    %165 = arith.truncf %162 : vector<16x16xf32> to vector<16x16xbf16>
    %166 = vector.extract_strided_slice %119 {offsets = [0, 32], sizes = [16, 32], strides = [1, 1]} : vector<16x128xbf16> to vector<16x32xbf16>
    %cst_41 = arith.constant dense<0.000000e+00> : vector<16x32xf32>
    %167 = tpu.matmul %165, %166, %cst_41 {dimension_numbers = #tpu.dot_dimension_numbers<[1], [0], [0], [1], [0, 0, 1, 1], [], []>} : vector<16x16xbf16>, vector<16x32xbf16>, vector<16x32xf32> -> vector<16x32xf32>
    %168 = tpu.reciprocal %164 {approx = true} : vector<16x1xf32> -> vector<16x1xf32>
    %cst_42 = arith.constant 2.500000e-01 : f32
    %169 = vector.broadcast %cst_42 : f32 to vector<16x1xf32>
    %170 = arith.mulf %168, %169 : vector<16x1xf32>
    %171 = vector.broadcast %170 : vector<16x1xf32> to vector<16x32xf32>
    %172 = arith.mulf %167, %171 : vector<16x32xf32>
    %173 = arith.addf %148, %172 : vector<16x32xf32>
    %174 = vector.extract_strided_slice %120 {offsets = [0, 2], sizes = [16, 1], strides = [1, 1]} : vector<16x4xf32> to vector<16x1xf32>
    %175 = vector.extract_strided_slice %122 {offsets = [2, 0], sizes = [1, 16], strides = [1, 1]} : vector<4x16xf32> to vector<1x16xf32>
    %176 = vector.broadcast %174 : vector<16x1xf32> to vector<16x16xf32>
    %177 = vector.broadcast %175 : vector<1x16xf32> to vector<16x16xf32>
    %178 = arith.addf %176, %177 : vector<16x16xf32>
    %cst_43 = arith.constant 2.000000e-01 : f32
    %179 = vector.broadcast %cst_43 : f32 to vector<16x16xf32>
    %180 = arith.mulf %179, %178 : vector<16x16xf32>
    %181 = arith.maximumf %178, %180 : vector<16x16xf32>
    %182 = arith.addf %181, %2 : vector<16x16xf32>
    %cst_44 = arith.constant dense<0xFF800000> : vector<16xf32>
    %183 = vector.multi_reduction <maximumf>, %182, %cst_44 [1] : vector<16x16xf32> to vector<16xf32>
    %184 = vector.shape_cast %183 : vector<16xf32> to vector<16x1xf32>
    %185 = vector.broadcast %184 : vector<16x1xf32> to vector<16x16xf32>
    %186 = arith.subf %182, %185 : vector<16x16xf32>
    %187 = math.exp %186 : vector<16x16xf32>
    %cst_45 = arith.constant dense<0.000000e+00> : vector<16xf32>
    %188 = vector.multi_reduction <add>, %187, %cst_45 [1] : vector<16x16xf32> to vector<16xf32>
    %189 = vector.shape_cast %188 : vector<16xf32> to vector<16x1xf32>
    %190 = arith.truncf %187 : vector<16x16xf32> to vector<16x16xbf16>
    %191 = vector.extract_strided_slice %119 {offsets = [0, 64], sizes = [16, 32], strides = [1, 1]} : vector<16x128xbf16> to vector<16x32xbf16>
    %cst_46 = arith.constant dense<0.000000e+00> : vector<16x32xf32>
    %192 = tpu.matmul %190, %191, %cst_46 {dimension_numbers = #tpu.dot_dimension_numbers<[1], [0], [0], [1], [0, 0, 1, 1], [], []>} : vector<16x16xbf16>, vector<16x32xbf16>, vector<16x32xf32> -> vector<16x32xf32>
    %193 = tpu.reciprocal %189 {approx = true} : vector<16x1xf32> -> vector<16x1xf32>
    %cst_47 = arith.constant 2.500000e-01 : f32
    %194 = vector.broadcast %cst_47 : f32 to vector<16x1xf32>
    %195 = arith.mulf %193, %194 : vector<16x1xf32>
    %196 = vector.broadcast %195 : vector<16x1xf32> to vector<16x32xf32>
    %197 = arith.mulf %192, %196 : vector<16x32xf32>
    %198 = arith.addf %173, %197 : vector<16x32xf32>
    %199 = vector.extract_strided_slice %120 {offsets = [0, 3], sizes = [16, 1], strides = [1, 1]} : vector<16x4xf32> to vector<16x1xf32>
    %200 = vector.extract_strided_slice %122 {offsets = [3, 0], sizes = [1, 16], strides = [1, 1]} : vector<4x16xf32> to vector<1x16xf32>
    %201 = vector.broadcast %199 : vector<16x1xf32> to vector<16x16xf32>
    %202 = vector.broadcast %200 : vector<1x16xf32> to vector<16x16xf32>
    %203 = arith.addf %201, %202 : vector<16x16xf32>
    %cst_48 = arith.constant 2.000000e-01 : f32
    %204 = vector.broadcast %cst_48 : f32 to vector<16x16xf32>
    %205 = arith.mulf %204, %203 : vector<16x16xf32>
    %206 = arith.maximumf %203, %205 : vector<16x16xf32>
    %207 = arith.addf %206, %2 : vector<16x16xf32>
    %cst_49 = arith.constant dense<0xFF800000> : vector<16xf32>
    %208 = vector.multi_reduction <maximumf>, %207, %cst_49 [1] : vector<16x16xf32> to vector<16xf32>
    %209 = vector.shape_cast %208 : vector<16xf32> to vector<16x1xf32>
    %210 = vector.broadcast %209 : vector<16x1xf32> to vector<16x16xf32>
    %211 = arith.subf %207, %210 : vector<16x16xf32>
    %212 = math.exp %211 : vector<16x16xf32>
    %cst_50 = arith.constant dense<0.000000e+00> : vector<16xf32>
    %213 = vector.multi_reduction <add>, %212, %cst_50 [1] : vector<16x16xf32> to vector<16xf32>
    %214 = vector.shape_cast %213 : vector<16xf32> to vector<16x1xf32>
    %215 = arith.truncf %212 : vector<16x16xf32> to vector<16x16xbf16>
    %216 = vector.extract_strided_slice %119 {offsets = [0, 96], sizes = [16, 32], strides = [1, 1]} : vector<16x128xbf16> to vector<16x32xbf16>
    %cst_51 = arith.constant dense<0.000000e+00> : vector<16x32xf32>
    %217 = tpu.matmul %215, %216, %cst_51 {dimension_numbers = #tpu.dot_dimension_numbers<[1], [0], [0], [1], [0, 0, 1, 1], [], []>} : vector<16x16xbf16>, vector<16x32xbf16>, vector<16x32xf32> -> vector<16x32xf32>
    %218 = tpu.reciprocal %214 {approx = true} : vector<16x1xf32> -> vector<16x1xf32>
    %cst_52 = arith.constant 2.500000e-01 : f32
    %219 = vector.broadcast %cst_52 : f32 to vector<16x1xf32>
    %220 = arith.mulf %218, %219 : vector<16x1xf32>
    %221 = vector.broadcast %220 : vector<16x1xf32> to vector<16x32xf32>
    %222 = arith.mulf %217, %221 : vector<16x32xf32>
    %223 = arith.addf %198, %222 : vector<16x32xf32>
    %c0_53 = arith.constant 0 : index
    %c0_54 = arith.constant 0 : index
    %224 = vector.load %arg5[%c0_53, %c0_54] : memref<1x32xf32, #tpu.memory_space<vmem>>, vector<1x32xf32>
    %225 = vector.broadcast %224 : vector<1x32xf32> to vector<16x32xf32>
    %226 = arith.addf %223, %225 : vector<16x32xf32>
    %cst_55 = arith.constant 0.000000e+00 : f32
    %227 = vector.broadcast %cst_55 : f32 to vector<16x32xf32>
    %228 = arith.maximumf %226, %227 : vector<16x32xf32>
    %c0_56 = arith.constant 0 : index
    %c0_57 = arith.constant 0 : index
    %229 = vector.load %arg6[%c0_56, %c0_57] : memref<32x128xf32, #tpu.memory_space<vmem>>, vector<32x128xf32>
    %cst_58 = arith.constant dense<0.000000e+00> : vector<16x128xf32>
    %230 = tpu.matmul %228, %229, %cst_58 {dimension_numbers = #tpu.dot_dimension_numbers<[1], [0], [0], [1], [0, 0, 1, 1], [], []>} : vector<16x32xf32>, vector<32x128xf32>, vector<16x128xf32> -> vector<16x128xf32>
    %231 = vector.extract_strided_slice %230 {offsets = [0, 0], sizes = [16, 64], strides = [1, 1]} : vector<16x128xf32> to vector<16x64xf32>
    %232 = arith.truncf %231 : vector<16x64xf32> to vector<16x64xbf16>
    %233 = vector.extract_strided_slice %230 {offsets = [0, 64], sizes = [16, 4], strides = [1, 1]} : vector<16x128xf32> to vector<16x4xf32>
    %234 = vector.extract_strided_slice %230 {offsets = [0, 68], sizes = [16, 4], strides = [1, 1]} : vector<16x128xf32> to vector<16x4xf32>
    %235 = tpu.transpose %234, [1, 0] : vector<16x4xf32> -> vector<4x16xf32>
    %cst_59 = arith.constant 0.000000e+00 : f32
    %236 = vector.broadcast %cst_59 : f32 to vector<16x16xf32>
    %237 = vector.extract_strided_slice %233 {offsets = [0, 0], sizes = [16, 1], strides = [1, 1]} : vector<16x4xf32> to vector<16x1xf32>
    %238 = vector.extract_strided_slice %235 {offsets = [0, 0], sizes = [1, 16], strides = [1, 1]} : vector<4x16xf32> to vector<1x16xf32>
    %239 = vector.broadcast %237 : vector<16x1xf32> to vector<16x16xf32>
    %240 = vector.broadcast %238 : vector<1x16xf32> to vector<16x16xf32>
    %241 = arith.addf %239, %240 : vector<16x16xf32>
    %cst_60 = arith.constant 2.000000e-01 : f32
    %242 = vector.broadcast %cst_60 : f32 to vector<16x16xf32>
    %243 = arith.mulf %242, %241 : vector<16x16xf32>
    %244 = arith.maximumf %241, %243 : vector<16x16xf32>
    %245 = arith.addf %244, %2 : vector<16x16xf32>
    %cst_61 = arith.constant dense<0xFF800000> : vector<16xf32>
    %246 = vector.multi_reduction <maximumf>, %245, %cst_61 [1] : vector<16x16xf32> to vector<16xf32>
    %247 = vector.shape_cast %246 : vector<16xf32> to vector<16x1xf32>
    %248 = vector.broadcast %247 : vector<16x1xf32> to vector<16x16xf32>
    %249 = arith.subf %245, %248 : vector<16x16xf32>
    %250 = math.exp %249 : vector<16x16xf32>
    %cst_62 = arith.constant dense<0.000000e+00> : vector<16xf32>
    %251 = vector.multi_reduction <add>, %250, %cst_62 [1] : vector<16x16xf32> to vector<16xf32>
    %252 = vector.shape_cast %251 : vector<16xf32> to vector<16x1xf32>
    %253 = arith.truncf %250 : vector<16x16xf32> to vector<16x16xbf16>
    %254 = vector.extract_strided_slice %232 {offsets = [0, 0], sizes = [16, 16], strides = [1, 1]} : vector<16x64xbf16> to vector<16x16xbf16>
    %cst_63 = arith.constant dense<0.000000e+00> : vector<16x16xf32>
    %255 = tpu.matmul %253, %254, %cst_63 {dimension_numbers = #tpu.dot_dimension_numbers<[1], [0], [0], [1], [0, 0, 1, 1], [], []>} : vector<16x16xbf16>, vector<16x16xbf16>, vector<16x16xf32> -> vector<16x16xf32>
    %256 = tpu.reciprocal %252 {approx = true} : vector<16x1xf32> -> vector<16x1xf32>
    %cst_64 = arith.constant 2.500000e-01 : f32
    %257 = vector.broadcast %cst_64 : f32 to vector<16x1xf32>
    %258 = arith.mulf %256, %257 : vector<16x1xf32>
    %259 = vector.broadcast %258 : vector<16x1xf32> to vector<16x16xf32>
    %260 = arith.mulf %255, %259 : vector<16x16xf32>
    %261 = arith.addf %236, %260 : vector<16x16xf32>
    %262 = vector.extract_strided_slice %233 {offsets = [0, 1], sizes = [16, 1], strides = [1, 1]} : vector<16x4xf32> to vector<16x1xf32>
    %263 = vector.extract_strided_slice %235 {offsets = [1, 0], sizes = [1, 16], strides = [1, 1]} : vector<4x16xf32> to vector<1x16xf32>
    %264 = vector.broadcast %262 : vector<16x1xf32> to vector<16x16xf32>
    %265 = vector.broadcast %263 : vector<1x16xf32> to vector<16x16xf32>
    %266 = arith.addf %264, %265 : vector<16x16xf32>
    %cst_65 = arith.constant 2.000000e-01 : f32
    %267 = vector.broadcast %cst_65 : f32 to vector<16x16xf32>
    %268 = arith.mulf %267, %266 : vector<16x16xf32>
    %269 = arith.maximumf %266, %268 : vector<16x16xf32>
    %270 = arith.addf %269, %2 : vector<16x16xf32>
    %cst_66 = arith.constant dense<0xFF800000> : vector<16xf32>
    %271 = vector.multi_reduction <maximumf>, %270, %cst_66 [1] : vector<16x16xf32> to vector<16xf32>
    %272 = vector.shape_cast %271 : vector<16xf32> to vector<16x1xf32>
    %273 = vector.broadcast %272 : vector<16x1xf32> to vector<16x16xf32>
    %274 = arith.subf %270, %273 : vector<16x16xf32>
    %275 = math.exp %274 : vector<16x16xf32>
    %cst_67 = arith.constant dense<0.000000e+00> : vector<16xf32>
    %276 = vector.multi_reduction <add>, %275, %cst_67 [1] : vector<16x16xf32> to vector<16xf32>
    %277 = vector.shape_cast %276 : vector<16xf32> to vector<16x1xf32>
    %278 = arith.truncf %275 : vector<16x16xf32> to vector<16x16xbf16>
    %279 = vector.extract_strided_slice %232 {offsets = [0, 16], sizes = [16, 16], strides = [1, 1]} : vector<16x64xbf16> to vector<16x16xbf16>
    %cst_68 = arith.constant dense<0.000000e+00> : vector<16x16xf32>
    %280 = tpu.matmul %278, %279, %cst_68 {dimension_numbers = #tpu.dot_dimension_numbers<[1], [0], [0], [1], [0, 0, 1, 1], [], []>} : vector<16x16xbf16>, vector<16x16xbf16>, vector<16x16xf32> -> vector<16x16xf32>
    %281 = tpu.reciprocal %277 {approx = true} : vector<16x1xf32> -> vector<16x1xf32>
    %cst_69 = arith.constant 2.500000e-01 : f32
    %282 = vector.broadcast %cst_69 : f32 to vector<16x1xf32>
    %283 = arith.mulf %281, %282 : vector<16x1xf32>
    %284 = vector.broadcast %283 : vector<16x1xf32> to vector<16x16xf32>
    %285 = arith.mulf %280, %284 : vector<16x16xf32>
    %286 = arith.addf %261, %285 : vector<16x16xf32>
    %287 = vector.extract_strided_slice %233 {offsets = [0, 2], sizes = [16, 1], strides = [1, 1]} : vector<16x4xf32> to vector<16x1xf32>
    %288 = vector.extract_strided_slice %235 {offsets = [2, 0], sizes = [1, 16], strides = [1, 1]} : vector<4x16xf32> to vector<1x16xf32>
    %289 = vector.broadcast %287 : vector<16x1xf32> to vector<16x16xf32>
    %290 = vector.broadcast %288 : vector<1x16xf32> to vector<16x16xf32>
    %291 = arith.addf %289, %290 : vector<16x16xf32>
    %cst_70 = arith.constant 2.000000e-01 : f32
    %292 = vector.broadcast %cst_70 : f32 to vector<16x16xf32>
    %293 = arith.mulf %292, %291 : vector<16x16xf32>
    %294 = arith.maximumf %291, %293 : vector<16x16xf32>
    %295 = arith.addf %294, %2 : vector<16x16xf32>
    %cst_71 = arith.constant dense<0xFF800000> : vector<16xf32>
    %296 = vector.multi_reduction <maximumf>, %295, %cst_71 [1] : vector<16x16xf32> to vector<16xf32>
    %297 = vector.shape_cast %296 : vector<16xf32> to vector<16x1xf32>
    %298 = vector.broadcast %297 : vector<16x1xf32> to vector<16x16xf32>
    %299 = arith.subf %295, %298 : vector<16x16xf32>
    %300 = math.exp %299 : vector<16x16xf32>
    %cst_72 = arith.constant dense<0.000000e+00> : vector<16xf32>
    %301 = vector.multi_reduction <add>, %300, %cst_72 [1] : vector<16x16xf32> to vector<16xf32>
    %302 = vector.shape_cast %301 : vector<16xf32> to vector<16x1xf32>
    %303 = arith.truncf %300 : vector<16x16xf32> to vector<16x16xbf16>
    %304 = vector.extract_strided_slice %232 {offsets = [0, 32], sizes = [16, 16], strides = [1, 1]} : vector<16x64xbf16> to vector<16x16xbf16>
    %cst_73 = arith.constant dense<0.000000e+00> : vector<16x16xf32>
    %305 = tpu.matmul %303, %304, %cst_73 {dimension_numbers = #tpu.dot_dimension_numbers<[1], [0], [0], [1], [0, 0, 1, 1], [], []>} : vector<16x16xbf16>, vector<16x16xbf16>, vector<16x16xf32> -> vector<16x16xf32>
    %306 = tpu.reciprocal %302 {approx = true} : vector<16x1xf32> -> vector<16x1xf32>
    %cst_74 = arith.constant 2.500000e-01 : f32
    %307 = vector.broadcast %cst_74 : f32 to vector<16x1xf32>
    %308 = arith.mulf %306, %307 : vector<16x1xf32>
    %309 = vector.broadcast %308 : vector<16x1xf32> to vector<16x16xf32>
    %310 = arith.mulf %305, %309 : vector<16x16xf32>
    %311 = arith.addf %286, %310 : vector<16x16xf32>
    %312 = vector.extract_strided_slice %233 {offsets = [0, 3], sizes = [16, 1], strides = [1, 1]} : vector<16x4xf32> to vector<16x1xf32>
    %313 = vector.extract_strided_slice %235 {offsets = [3, 0], sizes = [1, 16], strides = [1, 1]} : vector<4x16xf32> to vector<1x16xf32>
    %314 = vector.broadcast %312 : vector<16x1xf32> to vector<16x16xf32>
    %315 = vector.broadcast %313 : vector<1x16xf32> to vector<16x16xf32>
    %316 = arith.addf %314, %315 : vector<16x16xf32>
    %cst_75 = arith.constant 2.000000e-01 : f32
    %317 = vector.broadcast %cst_75 : f32 to vector<16x16xf32>
    %318 = arith.mulf %317, %316 : vector<16x16xf32>
    %319 = arith.maximumf %316, %318 : vector<16x16xf32>
    %320 = arith.addf %319, %2 : vector<16x16xf32>
    %cst_76 = arith.constant dense<0xFF800000> : vector<16xf32>
    %321 = vector.multi_reduction <maximumf>, %320, %cst_76 [1] : vector<16x16xf32> to vector<16xf32>
    %322 = vector.shape_cast %321 : vector<16xf32> to vector<16x1xf32>
    %323 = vector.broadcast %322 : vector<16x1xf32> to vector<16x16xf32>
    %324 = arith.subf %320, %323 : vector<16x16xf32>
    %325 = math.exp %324 : vector<16x16xf32>
    %cst_77 = arith.constant dense<0.000000e+00> : vector<16xf32>
    %326 = vector.multi_reduction <add>, %325, %cst_77 [1] : vector<16x16xf32> to vector<16xf32>
    %327 = vector.shape_cast %326 : vector<16xf32> to vector<16x1xf32>
    %328 = arith.truncf %325 : vector<16x16xf32> to vector<16x16xbf16>
    %329 = vector.extract_strided_slice %232 {offsets = [0, 48], sizes = [16, 16], strides = [1, 1]} : vector<16x64xbf16> to vector<16x16xbf16>
    %cst_78 = arith.constant dense<0.000000e+00> : vector<16x16xf32>
    %330 = tpu.matmul %328, %329, %cst_78 {dimension_numbers = #tpu.dot_dimension_numbers<[1], [0], [0], [1], [0, 0, 1, 1], [], []>} : vector<16x16xbf16>, vector<16x16xbf16>, vector<16x16xf32> -> vector<16x16xf32>
    %331 = tpu.reciprocal %327 {approx = true} : vector<16x1xf32> -> vector<16x1xf32>
    %cst_79 = arith.constant 2.500000e-01 : f32
    %332 = vector.broadcast %cst_79 : f32 to vector<16x1xf32>
    %333 = arith.mulf %331, %332 : vector<16x1xf32>
    %334 = vector.broadcast %333 : vector<16x1xf32> to vector<16x16xf32>
    %335 = arith.mulf %330, %334 : vector<16x16xf32>
    %336 = arith.addf %311, %335 : vector<16x16xf32>
    %c0_80 = arith.constant 0 : index
    %c0_81 = arith.constant 0 : index
    %337 = vector.load %arg7[%c0_80, %c0_81] : memref<1x16xf32, #tpu.memory_space<vmem>>, vector<1x16xf32>
    %338 = vector.broadcast %337 : vector<1x16xf32> to vector<16x16xf32>
    %339 = arith.addf %336, %338 : vector<16x16xf32>
    %cst_82 = arith.constant 0.000000e+00 : f32
    %340 = vector.broadcast %cst_82 : f32 to vector<16x16xf32>
    %341 = arith.maximumf %339, %340 : vector<16x16xf32>
    %cst_83 = arith.constant 0.000000e+00 : f32
    %342 = vector.broadcast %cst_83 : f32 to vector<16x112xf32>
    %343 = tpu.concatenate %341, %342 in 1 : vector<16x16xf32>, vector<16x112xf32> -> vector<16x128xf32>
    %c0_84 = arith.constant 0 : index
    %c0_85 = arith.constant 0 : index
    %344 = vector.load %arg8[%c0_84, %c0_85] : memref<16x128xf32, #tpu.memory_space<vmem>>, vector<16x128xf32>
    tpu.vector_store %arg8[%c0_84, %c0_85], %343 {strides = array<i32>} : memref<16x128xf32, #tpu.memory_space<vmem>>, vector<16x128xf32>,
    return
  }
}

</mosaic_0001>

<llo_original>
// kernel: tpu_custom_call.1
$region0: #{tpu_custom_call.1}
  #allocation0 [shape = 'u32[]', space=smem, size = 0x4, offset = 0x4, fixed_abs, tag = 'smem constant byte address 0x4 - core index']
  #allocation1 [shape = 'u32[144,128]{1,0:T(1,128)}', space=vmem, size = 0x12000, scoped, tag = 'internal scratch']
  %s0 = inlined_call_operand.vmem [shape: f32[16,8], index: 0, kind: input, shape index: {}]
  %s1 = inlined_call_operand.hbm [shape: bf16[16,16], index: 1, kind: input, shape index: {}]
  %s2 = inlined_call_operand.hbm [shape: f32[8,256], index: 2, kind: input, shape index: {}]
  %s3 = inlined_call_operand.vmem [shape: f32[1,32], index: 3, kind: input, shape index: {}]
  %s4 = inlined_call_operand.hbm [shape: f32[32,256], index: 4, kind: input, shape index: {}]
  %s5 = inlined_call_operand.vmem [shape: f32[1,32], index: 5, kind: input, shape index: {}]
  %s6 = inlined_call_operand.vmem [shape: f32[32,128], index: 6, kind: input, shape index: {}]
  %s7 = inlined_call_operand.vmem [shape: f32[1,16], index: 7, kind: input, shape index: {}]
  %s8 = inlined_call_operand.hbm [shape: f32[16,128], index: 8, kind: output, shape index: {}]
  %s9 = sld [smem:[#allocation0]]
  $region54: #{tpu_custom_call.1} parent=0
    _
  %s11 = ssub.s32 1, %s9
  %s12 = scalar_select 0, %s11, %s9
  $region1: #{tpu_custom_call.1} parent=0
    #allocation2 [shape = 'u8[4096]{0}', space=vmem, size = 0x1000, scoped, tag = 'input window, operand 1, single buffered']
    #allocation3 [shape = 's32[1]{0}', space=sflag, size = 0x4, scoped, tag = 'scoped memory for tpu_custom_call.1']
    #allocation4 [shape = 's32[1]{0}', space=sflag, size = 0x4, scoped, tag = 'scoped memory for tpu_custom_call.1']
    #allocation5 [shape = 'u8[8192]{0}', space=vmem, size = 0x2000, scoped, tag = 'input window, operand 2, single buffered']
    #allocation6 [shape = 's32[1]{0}', space=sflag, size = 0x4, scoped, tag = 'scoped memory for tpu_custom_call.1']
    #allocation7 [shape = 'u8[32768]{0}', space=vmem, size = 0x8000, scoped, tag = 'input window, operand 4, single buffered']
    #allocation8 [shape = 'u8[8192]{0}', space=vmem, size = 0x2000, scoped, tag = 'output window, operand 0, single buffered']
    %13 = vsyncpa [#allocation3], 0
    %14 = vsyncpa [#allocation6], 0
    %15 = vsyncpa [#allocation4], 0
    // Predicated region
    $region2: #{tpu_custom_call.1} parent=1 // pred_check
      _
    $region3: #{tpu_custom_call.1} parent=1 // pred_check_branch
      %17 = sbr.rel (0) target = $region5
    $region4: #{tpu_custom_call.1} parent=1 // pred_region
      _
    $region5: #{tpu_custom_call.1} parent=1 // pred_fallthru
      _
    // Predicated region
    $region6: #{tpu_custom_call.1} parent=1 // pred_check
      _
    $region7: #{tpu_custom_call.1} parent=1 // pred_check_branch
      %19 = sbr.rel (0) target = $region9
    $region8: #{tpu_custom_call.1} parent=1 // pred_region
      %s21 = ssub.s32 128, 128
      %22 = vsyncadd [#allocation3], %s21
      %s23 = sshll.u32 [#allocation2], 4
      %s24 = int_to_ptr.vmem [resolvable:$true] %s23
      %29 = dma.hbm_to_vmem [thread:$0]  %s1, 128, %s24, [#allocation3], 64, 64, 4
    $region9: #{tpu_custom_call.1} parent=1 // pred_fallthru
      _
    // Predicated region
    $region10: #{tpu_custom_call.1} parent=1 // pred_check
      _
    $region11: #{tpu_custom_call.1} parent=1 // pred_check_branch
      %31 = sbr.rel (0) target = $region13
    $region12: #{tpu_custom_call.1} parent=1 // pred_region
      %s33 = ssub.s32 256, 256
      %34 = vsyncadd [#allocation6], %s33
      %s36 = sshll.u32 [#allocation5], 4
      %s37 = int_to_ptr.vmem [resolvable:$true] %s36
      %39 = dma.hbm_to_vmem [thread:$0]  %s2, 256, %s37, [#allocation6]
    $region13: #{tpu_custom_call.1} parent=1 // pred_fallthru
      _
    // Predicated region
    $region14: #{tpu_custom_call.1} parent=1 // pred_check
      _
    $region15: #{tpu_custom_call.1} parent=1 // pred_check_branch
      %41 = sbr.rel (0) target = $region17
    $region16: #{tpu_custom_call.1} parent=1 // pred_region
      _
    $region17: #{tpu_custom_call.1} parent=1 // pred_fallthru
      _
    // Predicated region
    $region18: #{tpu_custom_call.1} parent=1 // pred_check
      _
    $region19: #{tpu_custom_call.1} parent=1 // pred_check_branch
      %43 = sbr.rel (0) target = $region21
    $region20: #{tpu_custom_call.1} parent=1 // pred_region
      %s45 = ssub.s32 1024, 1024
      %46 = vsyncadd [#allocation6], %s45
      %s47 = sshll.u32 [#allocation7], 4
      %s48 = int_to_ptr.vmem [resolvable:$true] %s47
      %53 = dma.hbm_to_vmem [thread:$0]  %s4, 1024, %s48, [#allocation6], 256, 256, 16
    $region21: #{tpu_custom_call.1} parent=1 // pred_fallthru
      _
    // Predicated region
    $region22: #{tpu_custom_call.1} parent=1 // pred_check
      _
    $region23: #{tpu_custom_call.1} parent=1 // pred_check_branch
      %55 = sbr.rel (0) target = $region25
    $region24: #{tpu_custom_call.1} parent=1 // pred_region
      _
    $region25: #{tpu_custom_call.1} parent=1 // pred_fallthru
      _
    // Predicated region
    $region26: #{tpu_custom_call.1} parent=1 // pred_check
      _
    $region27: #{tpu_custom_call.1} parent=1 // pred_check_branch
      %57 = sbr.rel (0) target = $region29
    $region28: #{tpu_custom_call.1} parent=1 // pred_region
      _
    $region29: #{tpu_custom_call.1} parent=1 // pred_fallthru
      _
    // Predicated region
    $region30: #{tpu_custom_call.1} parent=1 // pred_check
      _
    $region31: #{tpu_custom_call.1} parent=1 // pred_check_branch
      %59 = sbr.rel (0) target = $region33
    $region32: #{tpu_custom_call.1} parent=1 // pred_region
      _
    $region33: #{tpu_custom_call.1} parent=1 // pred_fallthru
      _
    // Predicated region
    $region34: #{tpu_custom_call.1} parent=1 // pred_check
      _
    $region35: #{tpu_custom_call.1} parent=1 // pred_check_branch
      %61 = sbr.rel (0) target = $region37
    $region36: #{tpu_custom_call.1} parent=1 // pred_region
      %62 = dma.done [#allocation3], 128
    $region37: #{tpu_custom_call.1} parent=1 // pred_fallthru
      _
    // Predicated region
    $region38: #{tpu_custom_call.1} parent=1 // pred_check
      _
    $region39: #{tpu_custom_call.1} parent=1 // pred_check_branch
      %64 = sbr.rel (0) target = $region41
    $region40: #{tpu_custom_call.1} parent=1 // pred_region
      %65 = dma.done [#allocation6], 256
    $region41: #{tpu_custom_call.1} parent=1 // pred_fallthru
      _
    // Predicated region
    $region42: #{tpu_custom_call.1} parent=1 // pred_check
      _
    $region43: #{tpu_custom_call.1} parent=1 // pred_check_branch
      %67 = sbr.rel (0) target = $region45
    $region44: #{tpu_custom_call.1} parent=1 // pred_region
      %68 = dma.done [#allocation6], 1024
    $region45: #{tpu_custom_call.1} parent=1 // pred_fallthru
      _
    %v70 = vld [vmem:[%s0] sm:$0xff]
    %v71 = vld [vmem:[%s0 + $0x8] sm:$0xff]
    %v72 = vld [vmem:[#allocation2] sm:$0xf]
    %v73 = vld [vmem:[#allocation2 + $0x4] sm:$0xf]
    %v74 = vunpack.c.l.bf16 %v72
    %v75 = vunpack.c.l.bf16 %v73
    %v76 = vld [vmem:[#allocation5] sm:$0xff]
    %v77 = vld [vmem:[#allocation5 + $0x8] sm:$0xff]
    %vm78 = vcmask 64512
    %v80 = vsel %vm78, %v70, 0
    %v83 = vsel %vm78, %v71, 0
    %85 = vmatprep.subr.mxu0 0.0
    %86 = vmatpush1.msra.mxu0 0.0
    %87 = vmatprep.subr.mxu0 0.0
    %88 = vmatpush1.msra.mxu0 0.0
    %89 = vmatprep.subr.mxu0 0.0
    %90 = vmatpush1.msra.mxu0 0.0
    %91 = vmatprep.subr.mxu0 0.0
    %92 = vmatpush1.msra.mxu0 0.0
    %93 = vmatprep.subr.mxu0 0.0
    %94 = vmatpush1.msra.mxu0 0.0
    %95 = vmatprep.subr.mxu0 0.0
    %96 = vmatpush1.msra.mxu0 0.0
    %97 = vmatprep.subr.mxu0 0.0
    %98 = vmatpush1.msra.mxu0 0.0
    %99 = vmatprep.subr.mxu0 0.0
    %100 = vmatpush1.msra.mxu0 0.0
    %101 = vmatprep.subr.mxu0 0.0
    %102 = vmatpush1.msra.mxu0 0.0
    %103 = vmatprep.subr.mxu0 0.0
    %104 = vmatpush1.msra.mxu0 0.0
    %105 = vmatprep.subr.mxu0 0.0
    %106 = vmatpush1.msra.mxu0 0.0
    %107 = vmatprep.subr.mxu0 0.0
    %108 = vmatpush1.msra.mxu0 0.0
    %109 = vmatprep.subr.mxu0 0.0
    %110 = vmatpush1.msra.mxu0 0.0
    %111 = vmatprep.subr.mxu0 0.0
    %112 = vmatpush1.msra.mxu0 0.0
    %113 = vmatprep.subr.mxu0 0.0
    %114 = vmatpush1.msra.mxu0 0.0
    %115 = vmatprep.subr.mxu0 %v77
    %116 = vmatpush1.msra.mxu0 %v76
    %117 = vmatprep.subr.mxu0 0.0
    %118 = vmatpush2.msra.mxu0 0.0
    %119 = vmatprep.subr.mxu0 0.0
    %120 = vmatpush2.msra.mxu0 0.0
    %121 = vmatprep.subr.mxu0 0.0
    %122 = vmatpush2.msra.mxu0 0.0
    %123 = vmatprep.subr.mxu0 0.0
    %124 = vmatpush2.msra.mxu0 0.0
    %125 = vmatprep.subr.mxu0 0.0
    %126 = vmatpush2.msra.mxu0 0.0
    %127 = vmatprep.subr.mxu0 0.0
    %128 = vmatpush2.msra.mxu0 0.0
    %129 = vmatprep.subr.mxu0 0.0
    %130 = vmatpush2.msra.mxu0 0.0
    %131 = vmatprep.subr.mxu0 0.0
    %132 = vmatpush2.msra.mxu0 0.0
    %133 = vmatprep.subr.mxu0 0.0
    %134 = vmatpush2.msra.mxu0 0.0
    %135 = vmatprep.subr.mxu0 0.0
    %136 = vmatpush2.msra.mxu0 0.0
    %137 = vmatprep.subr.mxu0 0.0
    %138 = vmatpush2.msra.mxu0 0.0
    %139 = vmatprep.subr.mxu0 0.0
    %140 = vmatpush2.msra.mxu0 0.0
    %141 = vmatprep.subr.mxu0 0.0
    %142 = vmatpush2.msra.mxu0 0.0
    %143 = vmatprep.subr.mxu0 0.0
    %144 = vmatpush2.msra.mxu0 0.0
    %145 = vmatprep.subr.mxu0 0.0
    %146 = vmatpush2.msra.mxu0 0.0
    %147 = vmatprep.subr.mxu0 0.0
    %148 = vmatpush2.msra.mxu0 0.0
    %149 = vmatprep.mubr.f32.mxu0 0.0
    %150 = vmatmul.mubr.f32.gmra.mxu0 %v80
    %v151 = vpop.f32.mrf.mxu0
    %v152 = vadd.f32 0.0, %v151
    %v153 = vpop.f32.mrf.mxu0
    %v154 = vadd.f32 0.0, %v153
    %155 = vmatprep.mubr.f32.mxu0 0.0
    %156 = vmatmul.mubr.f32.gmra.mxu0 %v83
    %v157 = vpop.f32.mrf.mxu0
    %v158 = vadd.f32 0.0, %v157
    %v159 = vpop.f32.mrf.mxu0
    %v160 = vadd.f32 0.0, %v159
    %161 = vdwg.mxu0
    %v162 = vpack.c.bf16 %v158, %v152
    %165 = vrot.lane.b32.xlu0 %v154, 124
    %v166 = vpop.permute.xlu0 %165
    %167 = vrot.lane.b32.xlu0 %v160, 124
    %v168 = vpop.permute.xlu0 %167
    %171 = vxpose.xlu0.b32.start [1/16] %v166, 128
    %172 = vxpose.xlu0.b32.cont [2/16] %v168, 128
    %173 = vxpose.xlu0.b32.cont [3/16] 0.0, 128
    %174 = vxpose.xlu0.b32.cont [4/16] 0.0, 128
    %175 = vxpose.xlu0.b32.cont [5/16] 0.0, 128
    %176 = vxpose.xlu0.b32.cont [6/16] 0.0, 128
    %177 = vxpose.xlu0.b32.cont [7/16] 0.0, 128
    %178 = vxpose.xlu0.b32.cont [8/16] 0.0, 128
    %179 = vxpose.xlu0.b32.cont [9/16] 0.0, 128
    %180 = vxpose.xlu0.b32.cont [10/16] 0.0, 128
    %181 = vxpose.xlu0.b32.cont [11/16] 0.0, 128
    %182 = vxpose.xlu0.b32.cont [12/16] 0.0, 128
    %183 = vxpose.xlu0.b32.cont [13/16] 0.0, 128
    %184 = vxpose.xlu0.b32.cont [14/16] 0.0, 128
    %185 = vxpose.xlu0.b32.cont [15/16] 0.0, 128
    %186 = vxpose.xlu0.b32.end [16/16] 0.0, 128
    %v187 = vpop.trf.xlu0
    %v188 = vpop.trf.xlu0
    %v189 = vpop.trf.xlu0
    %v190 = vpop.trf.xlu0
    %v191 = vpop.trf.xlu0
    %v192 = vpop.trf.xlu0
    %v193 = vpop.trf.xlu0
    %v194 = vpop.trf.xlu0
    %v195 = vpop.trf.xlu0
    %v196 = vpop.trf.xlu0
    %v197 = vpop.trf.xlu0
    %v198 = vpop.trf.xlu0
    %v199 = vpop.trf.xlu0
    %v200 = vpop.trf.xlu0
    %v201 = vpop.trf.xlu0
    %v202 = vpop.trf.xlu0
    %203 = vset.pattern.permute.xlu0 0
    %204 = vperm.xlu0 %203, %v154
    %v205 = vpop.permute.xlu0 %204
    %207 = vset.pattern.permute.xlu0 0
    %208 = vperm.xlu0 %207, %v160
    %v209 = vpop.permute.xlu0 %208
    %v211 = vlaneseq
    %v212 = vshrl.u32 %v211, 7
    %v213 = vsub.s32 0, %v212
    %v214 = vrot.slane %v187, %v213
    %v215 = vadd.f32 %v205, %v214
    %v216 = vadd.f32 %v209, %v214
    %v217 = vmul.f32 %v215, 0.2
    %v218 = vmul.f32 %v216, 0.2
    %v219 = vmax.f32 %v215, %v217
    %v220 = vmax.f32 %v216, %v218
    %v221 = vadd.f32 %v219, %v74
    %v222 = vadd.f32 %v220, %v75
    %vm223 = vcmask 130048
    %v224 = vsel %vm223, %v221, -inf
    %225 = vmax.xlane.f32.xlu0 %v224
    %v226 = vpop.xlane.xlu0 %225
    %v227 = vsel %vm223, %v222, -inf
    %228 = vmax.xlane.f32.xlu0 %v227
    %v229 = vpop.xlane.xlu0 %228
    %v230 = vsub.f32 %v221, %v226
    %v231 = vsub.f32 %v222, %v229
    %v232 = vmul.f32 %v230, 1.442695
    %v233 = vpow.pop %v232
    %v234 = vmul.f32 %v231, 1.442695
    %v235 = vpow.pop %v234
    %v236 = vsel %vm223, %v233, 0.0
    %237 = vadd.xlane.f32.xlu0 %v236
    %v238 = vpop.xlane.xlu0 %237
    %v239 = vsel %vm223, %v235, 0.0
    %240 = vadd.xlane.f32.xlu0 %v239
    %v241 = vpop.xlane.xlu0 %240
    %v242 = vpack.c.bf16 %v235, %v233
    %v244 = vsel %vm223, %v242, 0
    %246 = vmatprep.subr.bf16.mxu0 0
    %247 = vmatpush1.bf16.msra.mxu0 0
    %248 = vmatprep.subr.bf16.mxu0 0
    %249 = vmatpush1.bf16.msra.mxu0 0
    %250 = vmatprep.subr.bf16.mxu0 0
    %251 = vmatpush1.bf16.msra.mxu0 0
    %252 = vmatprep.subr.bf16.mxu0 0
    %253 = vmatpush1.bf16.msra.mxu0 0
    %254 = vmatprep.subr.bf16.mxu0 0
    %255 = vmatpush1.bf16.msra.mxu0 0
    %256 = vmatprep.subr.bf16.mxu0 0
    %257 = vmatpush1.bf16.msra.mxu0 0
    %258 = vmatprep.subr.bf16.mxu0 0
    %259 = vmatpush1.bf16.msra.mxu0 0
    %260 = vmatprep.subr.bf16.mxu0 0
    %261 = vmatpush1.bf16.msra.mxu0 %v162
    %262 = vmatprep.subr.bf16.mxu0 0
    %263 = vmatpush2.bf16.msra.mxu0 0
    %264 = vmatprep.subr.bf16.mxu0 0
    %265 = vmatpush2.bf16.msra.mxu0 0
    %266 = vmatprep.subr.bf16.mxu0 0
    %267 = vmatpush2.bf16.msra.mxu0 0
    %268 = vmatprep.subr.bf16.mxu0 0
    %269 = vmatpush2.bf16.msra.mxu0 0
    %270 = vmatprep.subr.bf16.mxu0 0
    %271 = vmatpush2.bf16.msra.mxu0 0
    %272 = vmatprep.subr.bf16.mxu0 0
    %273 = vmatpush2.bf16.msra.mxu0 0
    %274 = vmatprep.subr.bf16.mxu0 0
    %275 = vmatpush2.bf16.msra.mxu0 0
    %276 = vmatprep.subr.bf16.mxu0 0
    %277 = vmatpush2.bf16.msra.mxu0 0
    %278 = vmatprep.mubr.bf16.mxu0 0
    %279 = vmatmul.mubr.bf16.gmra.mxu0 %v244
    %v280 = vpop.f32.mrf.mxu0
    %v281 = vadd.f32 0.0, %v280
    %v282 = vpop.f32.mrf.mxu0
    %v283 = vpop.f32.mrf.mxu0
    %v284 = vadd.f32 0.0, %v283
    %v285 = vpop.f32.mrf.mxu0
    %286 = vdwg.mxu0
    %v287 = vrcp.pop %v238
    %v288 = vrcp.pop %v241
    %v289 = vmul.f32 %v287, 0.25
    %v290 = vmul.f32 %v288, 0.25
    %v291 = vmul.f32 %v281, %v289
    %v292 = vmul.f32 %v284, %v290
    %v293 = vadd.f32 %v291, 0.0
    %v294 = vadd.f32 %v292, 0.0
    %295 = vset.pattern.permute.xlu0 1
    %296 = vperm.xlu0 %295, %v154
    %v297 = vpop.permute.xlu0 %296
    %299 = vset.pattern.permute.xlu0 1
    %300 = vperm.xlu0 %299, %v160
    %v301 = vpop.permute.xlu0 %300
    %v303 = vlaneseq
    %v304 = vshrl.u32 %v303, 7
    %v305 = vsub.s32 1, %v304
    %v306 = vrot.slane %v187, %v305
    %v307 = vadd.f32 %v297, %v306
    %v308 = vadd.f32 %v301, %v306
    %v309 = vmul.f32 %v307, 0.2
    %v310 = vmul.f32 %v308, 0.2
    %v311 = vmax.f32 %v307, %v309
    %v312 = vmax.f32 %v308, %v310
    %v313 = vadd.f32 %v311, %v74
    %v314 = vadd.f32 %v312, %v75
    %v315 = vsel %vm223, %v313, -inf
    %316 = vmax.xlane.f32.xlu0 %v315
    %v317 = vpop.xlane.xlu0 %316
    %v318 = vsel %vm223, %v314, -inf
    %319 = vmax.xlane.f32.xlu0 %v318
    %v320 = vpop.xlane.xlu0 %319
    %v321 = vsub.f32 %v313, %v317
    %v322 = vsub.f32 %v314, %v320
    %v323 = vmul.f32 %v321, 1.442695
    %v324 = vpow.pop %v323
    %v325 = vmul.f32 %v322, 1.442695
    %v326 = vpow.pop %v325
    %v327 = vsel %vm223, %v324, 0.0
    %328 = vadd.xlane.f32.xlu0 %v327
    %v329 = vpop.xlane.xlu0 %328
    %v330 = vsel %vm223, %v326, 0.0
    %331 = vadd.xlane.f32.xlu0 %v330
    %v332 = vpop.xlane.xlu0 %331
    %v333 = vpack.c.bf16 %v326, %v324
    %335 = vrot.lane.b32.xlu0 %v162, 96
    %v336 = vpop.permute.xlu0 %335
    %v339 = vsel %vm223, %v333, 0
    %341 = vmatprep.subr.bf16.mxu0 0
    %342 = vmatpush1.bf16.msra.mxu0 0
    %343 = vmatprep.subr.bf16.mxu0 0
    %344 = vmatpush1.bf16.msra.mxu0 0
    %345 = vmatprep.subr.bf16.mxu0 0
    %346 = vmatpush1.bf16.msra.mxu0 0
    %347 = vmatprep.subr.bf16.mxu0 0
    %348 = vmatpush1.bf16.msra.mxu0 0
    %349 = vmatprep.subr.bf16.mxu0 0
    %350 = vmatpush1.bf16.msra.mxu0 0
    %351 = vmatprep.subr.bf16.mxu0 0
    %352 = vmatpush1.bf16.msra.mxu0 0
    %353 = vmatprep.subr.bf16.mxu0 0
    %354 = vmatpush1.bf16.msra.mxu0 0
    %355 = vmatprep.subr.bf16.mxu0 0
    %356 = vmatpush1.bf16.msra.mxu0 %v336
    %357 = vmatprep.subr.bf16.mxu0 0
    %358 = vmatpush2.bf16.msra.mxu0 0
    %359 = vmatprep.subr.bf16.mxu0 0
    %360 = vmatpush2.bf16.msra.mxu0 0
    %361 = vmatprep.subr.bf16.mxu0 0
    %362 = vmatpush2.bf16.msra.mxu0 0
    %363 = vmatprep.subr.bf16.mxu0 0
    %364 = vmatpush2.bf16.msra.mxu0 0
    %365 = vmatprep.subr.bf16.mxu0 0
    %366 = vmatpush2.bf16.msra.mxu0 0
    %367 = vmatprep.subr.bf16.mxu0 0
    %368 = vmatpush2.bf16.msra.mxu0 0
    %369 = vmatprep.subr.bf16.mxu0 0
    %370 = vmatpush2.bf16.msra.mxu0 0
    %371 = vmatprep.subr.bf16.mxu0 0
    %372 = vmatpush2.bf16.msra.mxu0 0
    %373 = vmatprep.mubr.bf16.mxu0 0
    %374 = vmatmul.mubr.bf16.gmra.mxu0 %v339
    %v375 = vpop.f32.mrf.mxu0
    %v376 = vadd.f32 0.0, %v375
    %v377 = vpop.f32.mrf.mxu0
    %v378 = vpop.f32.mrf.mxu0
    %v379 = vadd.f32 0.0, %v378
    %v380 = vpop.f32.mrf.mxu0
    %381 = vdwg.mxu0
    %v382 = vrcp.pop %v329
    %v383 = vrcp.pop %v332
    %v384 = vmul.f32 %v382, 0.25
    %v385 = vmul.f32 %v383, 0.25
    %v386 = vmul.f32 %v376, %v384
    %v387 = vmul.f32 %v379, %v385
    %v388 = vadd.f32 %v293, %v386
    %v389 = vadd.f32 %v294, %v387
    %390 = vset.pattern.permute.xlu0 2
    %391 = vperm.xlu0 %390, %v154
    %v392 = vpop.permute.xlu0 %391
    %394 = vset.pattern.permute.xlu0 2
    %395 = vperm.xlu0 %394, %v160
    %v396 = vpop.permute.xlu0 %395
    %v398 = vlaneseq
    %v399 = vshrl.u32 %v398, 7
    %v400 = vsub.s32 2, %v399
    %v401 = vrot.slane %v187, %v400
    %v402 = vadd.f32 %v392, %v401
    %v403 = vadd.f32 %v396, %v401
    %v404 = vmul.f32 %v402, 0.2
    %v405 = vmul.f32 %v403, 0.2
    %v406 = vmax.f32 %v402, %v404
    %v407 = vmax.f32 %v403, %v405
    %v408 = vadd.f32 %v406, %v74
    %v409 = vadd.f32 %v407, %v75
    %v410 = vsel %vm223, %v408, -inf
    %411 = vmax.xlane.f32.xlu0 %v410
    %v412 = vpop.xlane.xlu0 %411
    %v413 = vsel %vm223, %v409, -inf
    %414 = vmax.xlane.f32.xlu0 %v413
    %v415 = vpop.xlane.xlu0 %414
    %v416 = vsub.f32 %v408, %v412
    %v417 = vsub.f32 %v409, %v415
    %v418 = vmul.f32 %v416, 1.442695
    %v419 = vpow.pop %v418
    %v420 = vmul.f32 %v417, 1.442695
    %v421 = vpow.pop %v420
    %v422 = vsel %vm223, %v419, 0.0
    %423 = vadd.xlane.f32.xlu0 %v422
    %v424 = vpop.xlane.xlu0 %423
    %v425 = vsel %vm223, %v421, 0.0
    %426 = vadd.xlane.f32.xlu0 %v425
    %v427 = vpop.xlane.xlu0 %426
    %v428 = vpack.c.bf16 %v421, %v419
    %429 = vrot.lane.b32.xlu0 %v162, 64
    %v430 = vpop.permute.xlu0 %429
    %v433 = vsel %vm223, %v428, 0
    %435 = vmatprep.subr.bf16.mxu0 0
    %436 = vmatpush1.bf16.msra.mxu0 0
    %437 = vmatprep.subr.bf16.mxu0 0
    %438 = vmatpush1.bf16.msra.mxu0 0
    %439 = vmatprep.subr.bf16.mxu0 0
    %440 = vmatpush1.bf16.msra.mxu0 0
    %441 = vmatprep.subr.bf16.mxu0 0
    %442 = vmatpush1.bf16.msra.mxu0 0
    %443 = vmatprep.subr.bf16.mxu0 0
    %444 = vmatpush1.bf16.msra.mxu0 0
    %445 = vmatprep.subr.bf16.mxu0 0
    %446 = vmatpush1.bf16.msra.mxu0 0
    %447 = vmatprep.subr.bf16.mxu0 0
    %448 = vmatpush1.bf16.msra.mxu0 0
    %449 = vmatprep.subr.bf16.mxu0 0
    %450 = vmatpush1.bf16.msra.mxu0 %v430
    %451 = vmatprep.subr.bf16.mxu0 0
    %452 = vmatpush2.bf16.msra.mxu0 0
    %453 = vmatprep.subr.bf16.mxu0 0
    %454 = vmatpush2.bf16.msra.mxu0 0
    %455 = vmatprep.subr.bf16.mxu0 0
    %456 = vmatpush2.bf16.msra.mxu0 0
    %457 = vmatprep.subr.bf16.mxu0 0
    %458 = vmatpush2.bf16.msra.mxu0 0
    %459 = vmatprep.subr.bf16.mxu0 0
    %460 = vmatpush2.bf16.msra.mxu0 0
    %461 = vmatprep.subr.bf16.mxu0 0
    %462 = vmatpush2.bf16.msra.mxu0 0
    %463 = vmatprep.subr.bf16.mxu0 0
    %464 = vmatpush2.bf16.msra.mxu0 0
    %465 = vmatprep.subr.bf16.mxu0 0
    %466 = vmatpush2.bf16.msra.mxu0 0
    %467 = vmatprep.mubr.bf16.mxu0 0
    %468 = vmatmul.mubr.bf16.gmra.mxu0 %v433
    %v469 = vpop.f32.mrf.mxu0
    %v470 = vadd.f32 0.0, %v469
    %v471 = vpop.f32.mrf.mxu0
    %v472 = vpop.f32.mrf.mxu0
    %v473 = vadd.f32 0.0, %v472
    %v474 = vpop.f32.mrf.mxu0
    %475 = vdwg.mxu0
    %v476 = vrcp.pop %v424
    %v477 = vrcp.pop %v427
    %v478 = vmul.f32 %v476, 0.25
    %v479 = vmul.f32 %v477, 0.25
    %v480 = vmul.f32 %v470, %v478
    %v481 = vmul.f32 %v473, %v479
    %v482 = vadd.f32 %v388, %v480
    %v483 = vadd.f32 %v389, %v481
    %484 = vset.pattern.permute.xlu0 3
    %485 = vperm.xlu0 %484, %v154
    %v486 = vpop.permute.xlu0 %485
    %488 = vset.pattern.permute.xlu0 3
    %489 = vperm.xlu0 %488, %v160
    %v490 = vpop.permute.xlu0 %489
    %v492 = vlaneseq
    %v493 = vshrl.u32 %v492, 7
    %v494 = vsub.s32 3, %v493
    %v495 = vrot.slane %v187, %v494
    %v496 = vadd.f32 %v486, %v495
    %v497 = vadd.f32 %v490, %v495
    %v498 = vmul.f32 %v496, 0.2
    %v499 = vmul.f32 %v497, 0.2
    %v500 = vmax.f32 %v496, %v498
    %v501 = vmax.f32 %v497, %v499
    %v502 = vadd.f32 %v500, %v74
    %v503 = vadd.f32 %v501, %v75
    %v504 = vsel %vm223, %v502, -inf
    %505 = vmax.xlane.f32.xlu0 %v504
    %v506 = vpop.xlane.xlu0 %505
    %v507 = vsel %vm223, %v503, -inf
    %508 = vmax.xlane.f32.xlu0 %v507
    %v509 = vpop.xlane.xlu0 %508
    %v510 = vsub.f32 %v502, %v506
    %v511 = vsub.f32 %v503, %v509
    %v512 = vmul.f32 %v510, 1.442695
    %v513 = vpow.pop %v512
    %v514 = vmul.f32 %v511, 1.442695
    %v515 = vpow.pop %v514
    %v516 = vsel %vm223, %v513, 0.0
    %517 = vadd.xlane.f32.xlu0 %v516
    %v518 = vpop.xlane.xlu0 %517
    %v519 = vsel %vm223, %v515, 0.0
    %520 = vadd.xlane.f32.xlu0 %v519
    %v521 = vpop.xlane.xlu0 %520
    %v522 = vpack.c.bf16 %v515, %v513
    %523 = vrot.lane.b32.xlu0 %v162, 32
    %v524 = vpop.permute.xlu0 %523
    %v527 = vsel %vm223, %v522, 0
    %529 = vmatprep.subr.bf16.mxu0 0
    %530 = vmatpush1.bf16.msra.mxu0 0
    %531 = vmatprep.subr.bf16.mxu0 0
    %532 = vmatpush1.bf16.msra.mxu0 0
    %533 = vmatprep.subr.bf16.mxu0 0
    %534 = vmatpush1.bf16.msra.mxu0 0
    %535 = vmatprep.subr.bf16.mxu0 0
    %536 = vmatpush1.bf16.msra.mxu0 0
    %537 = vmatprep.subr.bf16.mxu0 0
    %538 = vmatpush1.bf16.msra.mxu0 0
    %539 = vmatprep.subr.bf16.mxu0 0
    %540 = vmatpush1.bf16.msra.mxu0 0
    %541 = vmatprep.subr.bf16.mxu0 0
    %542 = vmatpush1.bf16.msra.mxu0 0
    %543 = vmatprep.subr.bf16.mxu0 0
    %544 = vmatpush1.bf16.msra.mxu0 %v524
    %545 = vmatprep.subr.bf16.mxu0 0
    %546 = vmatpush2.bf16.msra.mxu0 0
    %547 = vmatprep.subr.bf16.mxu0 0
    %548 = vmatpush2.bf16.msra.mxu0 0
    %549 = vmatprep.subr.bf16.mxu0 0
    %550 = vmatpush2.bf16.msra.mxu0 0
    %551 = vmatprep.subr.bf16.mxu0 0
    %552 = vmatpush2.bf16.msra.mxu0 0
    %553 = vmatprep.subr.bf16.mxu0 0
    %554 = vmatpush2.bf16.msra.mxu0 0
    %555 = vmatprep.subr.bf16.mxu0 0
    %556 = vmatpush2.bf16.msra.mxu0 0
    %557 = vmatprep.subr.bf16.mxu0 0
    %558 = vmatpush2.bf16.msra.mxu0 0
    %559 = vmatprep.subr.bf16.mxu0 0
    %560 = vmatpush2.bf16.msra.mxu0 0
    %561 = vmatprep.mubr.bf16.mxu0 0
    %562 = vmatmul.mubr.bf16.gmra.mxu0 %v527
    %v563 = vpop.f32.mrf.mxu0
    %v564 = vadd.f32 0.0, %v563
    %v565 = vpop.f32.mrf.mxu0
    %v566 = vpop.f32.mrf.mxu0
    %v567 = vadd.f32 0.0, %v566
    %v568 = vpop.f32.mrf.mxu0
    %569 = vdwg.mxu0
    %v570 = vrcp.pop %v518
    %v571 = vrcp.pop %v521
    %v572 = vmul.f32 %v570, 0.25
    %v573 = vmul.f32 %v571, 0.25
    %v574 = vmul.f32 %v564, %v572
    %v575 = vmul.f32 %v567, %v573
    %v576 = vadd.f32 %v482, %v574
    %v577 = vadd.f32 %v483, %v575
    %v578 = vld [vmem:[%s3] sm:$0x1]
    %v580 = vlaneseq
    %v581 = vshrl.u32 %v580, 7
    %v582 = vsub.s32 0, %v581
    %v583 = vrot.slane %v578, %v582
    %v585 = vadd.f32 %v576, %v583
    %v586 = vadd.f32 %v577, %v583
    %v587 = vmax.f32 %v585, 0.0
    %v588 = vmax.f32 %v586, 0.0
    %v589 = vld [vmem:[#allocation7] sm:$0xff]
    %v590 = vld [vmem:[#allocation7 + $0x8] sm:$0xff]
    %v591 = vld [vmem:[#allocation7 + $0x10] sm:$0xff]
    %v592 = vld [vmem:[#allocation7 + $0x18] sm:$0xff]
    %v593 = vld [vmem:[#allocation7 + $0x20] sm:$0xff]
    %v594 = vld [vmem:[#allocation7 + $0x28] sm:$0xff]
    %v595 = vld [vmem:[#allocation7 + $0x30] sm:$0xff]
    %v596 = vld [vmem:[#allocation7 + $0x38] sm:$0xff]
    %vm597 = vcmask 261120
    %v599 = vsel %vm597, %v587, 0
    %v602 = vsel %vm597, %v588, 0
    %604 = vmatprep.subr.mxu0 0.0
    %605 = vmatpush1.msra.mxu0 0.0
    %606 = vmatprep.subr.mxu0 0.0
    %607 = vmatpush1.msra.mxu0 0.0
    %608 = vmatprep.subr.mxu0 0.0
    %609 = vmatpush1.msra.mxu0 0.0
    %610 = vmatprep.subr.mxu0 0.0
    %611 = vmatpush1.msra.mxu0 0.0
    %612 = vmatprep.subr.mxu0 0.0
    %613 = vmatpush1.msra.mxu0 0.0
    %614 = vmatprep.subr.mxu0 0.0
    %615 = vmatpush1.msra.mxu0 0.0
    %616 = vmatprep.subr.mxu0 0.0
    %617 = vmatpush1.msra.mxu0 0.0
    %618 = vmatprep.subr.mxu0 0.0
    %619 = vmatpush1.msra.mxu0 0.0
    %620 = vmatprep.subr.mxu0 0.0
    %621 = vmatpush1.msra.mxu0 0.0
    %622 = vmatprep.subr.mxu0 0.0
    %623 = vmatpush1.msra.mxu0 0.0
    %624 = vmatprep.subr.mxu0 0.0
    %625 = vmatpush1.msra.mxu0 0.0
    %626 = vmatprep.subr.mxu0 0.0
    %627 = vmatpush1.msra.mxu0 0.0
    %628 = vmatprep.subr.mxu0 %v596
    %629 = vmatpush1.msra.mxu0 %v595
    %630 = vmatprep.subr.mxu0 %v594
    %631 = vmatpush1.msra.mxu0 %v593
    %632 = vmatprep.subr.mxu0 %v592
    %633 = vmatpush1.msra.mxu0 %v591
    %634 = vmatprep.subr.mxu0 %v590
    %635 = vmatpush1.msra.mxu0 %v589
    %636 = vmatprep.subr.mxu0 0.0
    %637 = vmatpush2.msra.mxu0 0.0
    %638 = vmatprep.subr.mxu0 0.0
    %639 = vmatpush2.msra.mxu0 0.0
    %640 = vmatprep.subr.mxu0 0.0
    %641 = vmatpush2.msra.mxu0 0.0
    %642 = vmatprep.subr.mxu0 0.0
    %643 = vmatpush2.msra.mxu0 0.0
    %644 = vmatprep.subr.mxu0 0.0
    %645 = vmatpush2.msra.mxu0 0.0
    %646 = vmatprep.subr.mxu0 0.0
    %647 = vmatpush2.msra.mxu0 0.0
    %648 = vmatprep.subr.mxu0 0.0
    %649 = vmatpush2.msra.mxu0 0.0
    %650 = vmatprep.subr.mxu0 0.0
    %651 = vmatpush2.msra.mxu0 0.0
    %652 = vmatprep.subr.mxu0 0.0
    %653 = vmatpush2.msra.mxu0 0.0
    %654 = vmatprep.subr.mxu0 0.0
    %655 = vmatpush2.msra.mxu0 0.0
    %656 = vmatprep.subr.mxu0 0.0
    %657 = vmatpush2.msra.mxu0 0.0
    %658 = vmatprep.subr.mxu0 0.0
    %659 = vmatpush2.msra.mxu0 0.0
    %660 = vmatprep.subr.mxu0 0.0
    %661 = vmatpush2.msra.mxu0 0.0
    %662 = vmatprep.subr.mxu0 0.0
    %663 = vmatpush2.msra.mxu0 0.0
    %664 = vmatprep.subr.mxu0 0.0
    %665 = vmatpush2.msra.mxu0 0.0
    %666 = vmatprep.subr.mxu0 0.0
    %667 = vmatpush2.msra.mxu0 0.0
    %668 = vmatprep.mubr.f32.mxu0 0.0
    %669 = vmatmul.mubr.f32.gmra.mxu0 %v599
    %v670 = vpop.f32.mrf.mxu0
    %v671 = vadd.f32 0.0, %v670
    %v672 = vpop.f32.mrf.mxu0
    %v673 = vadd.f32 0.0, %v672
    %674 = vmatprep.mubr.f32.mxu0 0.0
    %675 = vmatmul.mubr.f32.gmra.mxu0 %v602
    %v676 = vpop.f32.mrf.mxu0
    %v677 = vadd.f32 0.0, %v676
    %v678 = vpop.f32.mrf.mxu0
    %v679 = vadd.f32 0.0, %v678
    %680 = vdwg.mxu0
    %v681 = vpack.c.bf16 %v677, %v671
    %684 = vrot.lane.b32.xlu0 %v673, 124
    %v685 = vpop.permute.xlu0 %684
    %686 = vrot.lane.b32.xlu0 %v679, 124
    %v687 = vpop.permute.xlu0 %686
    %690 = vxpose.xlu0.b32.start [1/16] %v685, 128
    %691 = vxpose.xlu0.b32.cont [2/16] %v687, 128
    %692 = vxpose.xlu0.b32.cont [3/16] 0.0, 128
    %693 = vxpose.xlu0.b32.cont [4/16] 0.0, 128
    %694 = vxpose.xlu0.b32.cont [5/16] 0.0, 128
    %695 = vxpose.xlu0.b32.cont [6/16] 0.0, 128
    %696 = vxpose.xlu0.b32.cont [7/16] 0.0, 128
    %697 = vxpose.xlu0.b32.cont [8/16] 0.0, 128
    %698 = vxpose.xlu0.b32.cont [9/16] 0.0, 128
    %699 = vxpose.xlu0.b32.cont [10/16] 0.0, 128
    %700 = vxpose.xlu0.b32.cont [11/16] 0.0, 128
    %701 = vxpose.xlu0.b32.cont [12/16] 0.0, 128
    %702 = vxpose.xlu0.b32.cont [13/16] 0.0, 128
    %703 = vxpose.xlu0.b32.cont [14/16] 0.0, 128
    %704 = vxpose.xlu0.b32.cont [15/16] 0.0, 128
    %705 = vxpose.xlu0.b32.end [16/16] 0.0, 128
    %v706 = vpop.trf.xlu0
    %v707 = vpop.trf.xlu0
    %v708 = vpop.trf.xlu0
    %v709 = vpop.trf.xlu0
    %v710 = vpop.trf.xlu0
    %v711 = vpop.trf.xlu0
    %v712 = vpop.trf.xlu0
    %v713 = vpop.trf.xlu0
    %v714 = vpop.trf.xlu0
    %v715 = vpop.trf.xlu0
    %v716 = vpop.trf.xlu0
    %v717 = vpop.trf.xlu0
    %v718 = vpop.trf.xlu0
    %v719 = vpop.trf.xlu0
    %v720 = vpop.trf.xlu0
    %v721 = vpop.trf.xlu0
    %722 = vset.pattern.permute.xlu0 0
    %723 = vperm.xlu0 %722, %v673
    %v724 = vpop.permute.xlu0 %723
    %726 = vset.pattern.permute.xlu0 0
    %727 = vperm.xlu0 %726, %v679
    %v728 = vpop.permute.xlu0 %727
    %v730 = vlaneseq
    %v731 = vshrl.u32 %v730, 7
    %v732 = vsub.s32 0, %v731
    %v733 = vrot.slane %v706, %v732
    %v734 = vadd.f32 %v724, %v733
    %v735 = vadd.f32 %v728, %v733
    %v736 = vmul.f32 %v734, 0.2
    %v737 = vmul.f32 %v735, 0.2
    %v738 = vmax.f32 %v734, %v736
    %v739 = vmax.f32 %v735, %v737
    %v740 = vadd.f32 %v738, %v74
    %v741 = vadd.f32 %v739, %v75
    %v742 = vsel %vm223, %v740, -inf
    %743 = vmax.xlane.f32.xlu0 %v742
    %v744 = vpop.xlane.xlu0 %743
    %v745 = vsel %vm223, %v741, -inf
    %746 = vmax.xlane.f32.xlu0 %v745
    %v747 = vpop.xlane.xlu0 %746
    %v748 = vsub.f32 %v740, %v744
    %v749 = vsub.f32 %v741, %v747
    %v750 = vmul.f32 %v748, 1.442695
    %v751 = vpow.pop %v750
    %v752 = vmul.f32 %v749, 1.442695
    %v753 = vpow.pop %v752
    %v754 = vsel %vm223, %v751, 0.0
    %755 = vadd.xlane.f32.xlu0 %v754
    %v756 = vpop.xlane.xlu0 %755
    %v757 = vsel %vm223, %v753, 0.0
    %758 = vadd.xlane.f32.xlu0 %v757
    %v759 = vpop.xlane.xlu0 %758
    %v760 = vpack.c.bf16 %v753, %v751
    %v762 = vsel %vm223, %v760, 0
    %764 = vmatprep.subr.bf16.mxu0 0
    %765 = vmatpush1.bf16.msra.mxu0 0
    %766 = vmatprep.subr.bf16.mxu0 0
    %767 = vmatpush1.bf16.msra.mxu0 0
    %768 = vmatprep.subr.bf16.mxu0 0
    %769 = vmatpush1.bf16.msra.mxu0 0
    %770 = vmatprep.subr.bf16.mxu0 0
    %771 = vmatpush1.bf16.msra.mxu0 0
    %772 = vmatprep.subr.bf16.mxu0 0
    %773 = vmatpush1.bf16.msra.mxu0 0
    %774 = vmatprep.subr.bf16.mxu0 0
    %775 = vmatpush1.bf16.msra.mxu0 0
    %776 = vmatprep.subr.bf16.mxu0 0
    %777 = vmatpush1.bf16.msra.mxu0 0
    %778 = vmatprep.subr.bf16.mxu0 0
    %779 = vmatpush1.bf16.msra.mxu0 %v681
    %780 = vmatprep.subr.bf16.mxu0 0
    %781 = vmatpush2.bf16.msra.mxu0 0
    %782 = vmatprep.subr.bf16.mxu0 0
    %783 = vmatpush2.bf16.msra.mxu0 0
    %784 = vmatprep.subr.bf16.mxu0 0
    %785 = vmatpush2.bf16.msra.mxu0 0
    %786 = vmatprep.subr.bf16.mxu0 0
    %787 = vmatpush2.bf16.msra.mxu0 0
    %788 = vmatprep.subr.bf16.mxu0 0
    %789 = vmatpush2.bf16.msra.mxu0 0
    %790 = vmatprep.subr.bf16.mxu0 0
    %791 = vmatpush2.bf16.msra.mxu0 0
    %792 = vmatprep.subr.bf16.mxu0 0
    %793 = vmatpush2.bf16.msra.mxu0 0
    %794 = vmatprep.subr.bf16.mxu0 0
    %795 = vmatpush2.bf16.msra.mxu0 0
    %796 = vmatprep.mubr.bf16.mxu0 0
    %797 = vmatmul.mubr.bf16.gmra.mxu0 %v762
    %v798 = vpop.f32.mrf.mxu0
    %v799 = vadd.f32 0.0, %v798
    %v800 = vpop.f32.mrf.mxu0
    %v801 = vpop.f32.mrf.mxu0
    %v802 = vadd.f32 0.0, %v801
    %v803 = vpop.f32.mrf.mxu0
    %804 = vdwg.mxu0
    %v805 = vrcp.pop %v756
    %v806 = vrcp.pop %v759
    %v807 = vmul.f32 %v805, 0.25
    %v808 = vmul.f32 %v806, 0.25
    %v809 = vmul.f32 %v799, %v807
    %v810 = vmul.f32 %v802, %v808
    %v811 = vadd.f32 %v809, 0.0
    %v812 = vadd.f32 %v810, 0.0
    %813 = vset.pattern.permute.xlu0 1
    %814 = vperm.xlu0 %813, %v673
    %v815 = vpop.permute.xlu0 %814
    %817 = vset.pattern.permute.xlu0 1
    %818 = vperm.xlu0 %817, %v679
    %v819 = vpop.permute.xlu0 %818
    %v821 = vlaneseq
    %v822 = vshrl.u32 %v821, 7
    %v823 = vsub.s32 1, %v822
    %v824 = vrot.slane %v706, %v823
    %v825 = vadd.f32 %v815, %v824
    %v826 = vadd.f32 %v819, %v824
    %v827 = vmul.f32 %v825, 0.2
    %v828 = vmul.f32 %v826, 0.2
    %v829 = vmax.f32 %v825, %v827
    %v830 = vmax.f32 %v826, %v828
    %v831 = vadd.f32 %v829, %v74
    %v832 = vadd.f32 %v830, %v75
    %v833 = vsel %vm223, %v831, -inf
    %834 = vmax.xlane.f32.xlu0 %v833
    %v835 = vpop.xlane.xlu0 %834
    %v836 = vsel %vm223, %v832, -inf
    %837 = vmax.xlane.f32.xlu0 %v836
    %v838 = vpop.xlane.xlu0 %837
    %v839 = vsub.f32 %v831, %v835
    %v840 = vsub.f32 %v832, %v838
    %v841 = vmul.f32 %v839, 1.442695
    %v842 = vpow.pop %v841
    %v843 = vmul.f32 %v840, 1.442695
    %v844 = vpow.pop %v843
    %v845 = vsel %vm223, %v842, 0.0
    %846 = vadd.xlane.f32.xlu0 %v845
    %v847 = vpop.xlane.xlu0 %846
    %v848 = vsel %vm223, %v844, 0.0
    %849 = vadd.xlane.f32.xlu0 %v848
    %v850 = vpop.xlane.xlu0 %849
    %v851 = vpack.c.bf16 %v844, %v842
    %853 = vrot.lane.b32.xlu0 %v681, 96
    %v854 = vpop.permute.xlu0 %853
    %v857 = vsel %vm223, %v851, 0
    %859 = vmatprep.subr.bf16.mxu0 0
    %860 = vmatpush1.bf16.msra.mxu0 0
    %861 = vmatprep.subr.bf16.mxu0 0
    %862 = vmatpush1.bf16.msra.mxu0 0
    %863 = vmatprep.subr.bf16.mxu0 0
    %864 = vmatpush1.bf16.msra.mxu0 0
    %865 = vmatprep.subr.bf16.mxu0 0
    %866 = vmatpush1.bf16.msra.mxu0 0
    %867 = vmatprep.subr.bf16.mxu0 0
    %868 = vmatpush1.bf16.msra.mxu0 0
    %869 = vmatprep.subr.bf16.mxu0 0
    %870 = vmatpush1.bf16.msra.mxu0 0
    %871 = vmatprep.subr.bf16.mxu0 0
    %872 = vmatpush1.bf16.msra.mxu0 0
    %873 = vmatprep.subr.bf16.mxu0 0
    %874 = vmatpush1.bf16.msra.mxu0 %v854
    %875 = vmatprep.subr.bf16.mxu0 0
    %876 = vmatpush2.bf16.msra.mxu0 0
    %877 = vmatprep.subr.bf16.mxu0 0
    %878 = vmatpush2.bf16.msra.mxu0 0
    %879 = vmatprep.subr.bf16.mxu0 0
    %880 = vmatpush2.bf16.msra.mxu0 0
    %881 = vmatprep.subr.bf16.mxu0 0
    %882 = vmatpush2.bf16.msra.mxu0 0
    %883 = vmatprep.subr.bf16.mxu0 0
    %884 = vmatpush2.bf16.msra.mxu0 0
    %885 = vmatprep.subr.bf16.mxu0 0
    %886 = vmatpush2.bf16.msra.mxu0 0
    %887 = vmatprep.subr.bf16.mxu0 0
    %888 = vmatpush2.bf16.msra.mxu0 0
    %889 = vmatprep.subr.bf16.mxu0 0
    %890 = vmatpush2.bf16.msra.mxu0 0
    %891 = vmatprep.mubr.bf16.mxu0 0
    %892 = vmatmul.mubr.bf16.gmra.mxu0 %v857
    %v893 = vpop.f32.mrf.mxu0
    %v894 = vadd.f32 0.0, %v893
    %v895 = vpop.f32.mrf.mxu0
    %v896 = vpop.f32.mrf.mxu0
    %v897 = vadd.f32 0.0, %v896
    %v898 = vpop.f32.mrf.mxu0
    %899 = vdwg.mxu0
    %v900 = vrcp.pop %v847
    %v901 = vrcp.pop %v850
    %v902 = vmul.f32 %v900, 0.25
    %v903 = vmul.f32 %v901, 0.25
    %v904 = vmul.f32 %v894, %v902
    %v905 = vmul.f32 %v897, %v903
    %v906 = vadd.f32 %v811, %v904
    %v907 = vadd.f32 %v812, %v905
    %908 = vset.pattern.permute.xlu0 2
    %909 = vperm.xlu0 %908, %v673
    %v910 = vpop.permute.xlu0 %909
    %912 = vset.pattern.permute.xlu0 2
    %913 = vperm.xlu0 %912, %v679
    %v914 = vpop.permute.xlu0 %913
    %v916 = vlaneseq
    %v917 = vshrl.u32 %v916, 7
    %v918 = vsub.s32 2, %v917
    %v919 = vrot.slane %v706, %v918
    %v920 = vadd.f32 %v910, %v919
    %v921 = vadd.f32 %v914, %v919
    %v922 = vmul.f32 %v920, 0.2
    %v923 = vmul.f32 %v921, 0.2
    %v924 = vmax.f32 %v920, %v922
    %v925 = vmax.f32 %v921, %v923
    %v926 = vadd.f32 %v924, %v74
    %v927 = vadd.f32 %v925, %v75
    %v928 = vsel %vm223, %v926, -inf
    %929 = vmax.xlane.f32.xlu0 %v928
    %v930 = vpop.xlane.xlu0 %929
    %v931 = vsel %vm223, %v927, -inf
    %932 = vmax.xlane.f32.xlu0 %v931
    %v933 = vpop.xlane.xlu0 %932
    %v934 = vsub.f32 %v926, %v930
    %v935 = vsub.f32 %v927, %v933
    %v936 = vmul.f32 %v934, 1.442695
    %v937 = vpow.pop %v936
    %v938 = vmul.f32 %v935, 1.442695
    %v939 = vpow.pop %v938
    %v940 = vsel %vm223, %v937, 0.0
    %941 = vadd.xlane.f32.xlu0 %v940
    %v942 = vpop.xlane.xlu0 %941
    %v943 = vsel %vm223, %v939, 0.0
    %944 = vadd.xlane.f32.xlu0 %v943
    %v945 = vpop.xlane.xlu0 %944
    %v946 = vpack.c.bf16 %v939, %v937
    %947 = vrot.lane.b32.xlu0 %v681, 64
    %v948 = vpop.permute.xlu0 %947
    %v951 = vsel %vm223, %v946, 0
    %953 = vmatprep.subr.bf16.mxu0 0
    %954 = vmatpush1.bf16.msra.mxu0 0
    %955 = vmatprep.subr.bf16.mxu0 0
    %956 = vmatpush1.bf16.msra.mxu0 0
    %957 = vmatprep.subr.bf16.mxu0 0
    %958 = vmatpush1.bf16.msra.mxu0 0
    %959 = vmatprep.subr.bf16.mxu0 0
    %960 = vmatpush1.bf16.msra.mxu0 0
    %961 = vmatprep.subr.bf16.mxu0 0
    %962 = vmatpush1.bf16.msra.mxu0 0
    %963 = vmatprep.subr.bf16.mxu0 0
    %964 = vmatpush1.bf16.msra.mxu0 0
    %965 = vmatprep.subr.bf16.mxu0 0
    %966 = vmatpush1.bf16.msra.mxu0 0
    %967 = vmatprep.subr.bf16.mxu0 0
    %968 = vmatpush1.bf16.msra.mxu0 %v948
    %969 = vmatprep.subr.bf16.mxu0 0
    %970 = vmatpush2.bf16.msra.mxu0 0
    %971 = vmatprep.subr.bf16.mxu0 0
    %972 = vmatpush2.bf16.msra.mxu0 0
    %973 = vmatprep.subr.bf16.mxu0 0
    %974 = vmatpush2.bf16.msra.mxu0 0
    %975 = vmatprep.subr.bf16.mxu0 0
    %976 = vmatpush2.bf16.msra.mxu0 0
    %977 = vmatprep.subr.bf16.mxu0 0
    %978 = vmatpush2.bf16.msra.mxu0 0
    %979 = vmatprep.subr.bf16.mxu0 0
    %980 = vmatpush2.bf16.msra.mxu0 0
    %981 = vmatprep.subr.bf16.mxu0 0
    %982 = vmatpush2.bf16.msra.mxu0 0
    %983 = vmatprep.subr.bf16.mxu0 0
    %984 = vmatpush2.bf16.msra.mxu0 0
    %985 = vmatprep.mubr.bf16.mxu0 0
    %986 = vmatmul.mubr.bf16.gmra.mxu0 %v951
    %v987 = vpop.f32.mrf.mxu0
    %v988 = vadd.f32 0.0, %v987
    %v989 = vpop.f32.mrf.mxu0
    %v990 = vpop.f32.mrf.mxu0
    %v991 = vadd.f32 0.0, %v990
    %v992 = vpop.f32.mrf.mxu0
    %993 = vdwg.mxu0
    %v994 = vrcp.pop %v942
    %v995 = vrcp.pop %v945
    %v996 = vmul.f32 %v994, 0.25
    %v997 = vmul.f32 %v995, 0.25
    %v998 = vmul.f32 %v988, %v996
    %v999 = vmul.f32 %v991, %v997
    %v1000 = vadd.f32 %v906, %v998
    %v1001 = vadd.f32 %v907, %v999
    %1002 = vset.pattern.permute.xlu0 3
    %1003 = vperm.xlu0 %1002, %v673
    %v1004 = vpop.permute.xlu0 %1003
    %1006 = vset.pattern.permute.xlu0 3
    %1007 = vperm.xlu0 %1006, %v679
    %v1008 = vpop.permute.xlu0 %1007
    %v1010 = vlaneseq
    %v1011 = vshrl.u32 %v1010, 7
    %v1012 = vsub.s32 3, %v1011
    %v1013 = vrot.slane %v706, %v1012
    %v1014 = vadd.f32 %v1004, %v1013
    %v1015 = vadd.f32 %v1008, %v1013
    %v1016 = vmul.f32 %v1014, 0.2
    %v1017 = vmul.f32 %v1015, 0.2
    %v1018 = vmax.f32 %v1014, %v1016
    %v1019 = vmax.f32 %v1015, %v1017
    %v1020 = vadd.f32 %v1018, %v74
    %v1021 = vadd.f32 %v1019, %v75
    %v1022 = vsel %vm223, %v1020, -inf
    %1023 = vmax.xlane.f32.xlu0 %v1022
    %v1024 = vpop.xlane.xlu0 %1023
    %v1025 = vsel %vm223, %v1021, -inf
    %1026 = vmax.xlane.f32.xlu0 %v1025
    %v1027 = vpop.xlane.xlu0 %1026
    %v1028 = vsub.f32 %v1020, %v1024
    %v1029 = vsub.f32 %v1021, %v1027
    %v1030 = vmul.f32 %v1028, 1.442695
    %v1031 = vpow.pop %v1030
    %v1032 = vmul.f32 %v1029, 1.442695
    %v1033 = vpow.pop %v1032
    %v1034 = vsel %vm223, %v1031, 0.0
    %1035 = vadd.xlane.f32.xlu0 %v1034
    %v1036 = vpop.xlane.xlu0 %1035
    %v1037 = vsel %vm223, %v1033, 0.0
    %1038 = vadd.xlane.f32.xlu0 %v1037
    %v1039 = vpop.xlane.xlu0 %1038
    %v1040 = vpack.c.bf16 %v1033, %v1031
    %1041 = vrot.lane.b32.xlu0 %v681, 32
    %v1042 = vpop.permute.xlu0 %1041
    %v1045 = vsel %vm223, %v1040, 0
    %1047 = vmatprep.subr.bf16.mxu0 0
    %1048 = vmatpush1.bf16.msra.mxu0 0
    %1049 = vmatprep.subr.bf16.mxu0 0
    %1050 = vmatpush1.bf16.msra.mxu0 0
    %1051 = vmatprep.subr.bf16.mxu0 0
    %1052 = vmatpush1.bf16.msra.mxu0 0
    %1053 = vmatprep.subr.bf16.mxu0 0
    %1054 = vmatpush1.bf16.msra.mxu0 0
    %1055 = vmatprep.subr.bf16.mxu0 0
    %1056 = vmatpush1.bf16.msra.mxu0 0
    %1057 = vmatprep.subr.bf16.mxu0 0
    %1058 = vmatpush1.bf16.msra.mxu0 0
    %1059 = vmatprep.subr.bf16.mxu0 0
    %1060 = vmatpush1.bf16.msra.mxu0 0
    %1061 = vmatprep.subr.bf16.mxu0 0
    %1062 = vmatpush1.bf16.msra.mxu0 %v1042
    %1063 = vmatprep.subr.bf16.mxu0 0
    %1064 = vmatpush2.bf16.msra.mxu0 0
    %1065 = vmatprep.subr.bf16.mxu0 0
    %1066 = vmatpush2.bf16.msra.mxu0 0
    %1067 = vmatprep.subr.bf16.mxu0 0
    %1068 = vmatpush2.bf16.msra.mxu0 0
    %1069 = vmatprep.subr.bf16.mxu0 0
    %1070 = vmatpush2.bf16.msra.mxu0 0
    %1071 = vmatprep.subr.bf16.mxu0 0
    %1072 = vmatpush2.bf16.msra.mxu0 0
    %1073 = vmatprep.subr.bf16.mxu0 0
    %1074 = vmatpush2.bf16.msra.mxu0 0
    %1075 = vmatprep.subr.bf16.mxu0 0
    %1076 = vmatpush2.bf16.msra.mxu0 0
    %1077 = vmatprep.subr.bf16.mxu0 0
    %1078 = vmatpush2.bf16.msra.mxu0 0
    %1079 = vmatprep.mubr.bf16.mxu0 0
    %1080 = vmatmul.mubr.bf16.gmra.mxu0 %v1045
    %v1081 = vpop.f32.mrf.mxu0
    %v1082 = vadd.f32 0.0, %v1081
    %v1083 = vpop.f32.mrf.mxu0
    %v1084 = vpop.f32.mrf.mxu0
    %v1085 = vadd.f32 0.0, %v1084
    %v1086 = vpop.f32.mrf.mxu0
    %1087 = vdwg.mxu0
    %v1088 = vrcp.pop %v1036
    %v1089 = vrcp.pop %v1039
    %v1090 = vmul.f32 %v1088, 0.25
    %v1091 = vmul.f32 %v1089, 0.25
    %v1092 = vmul.f32 %v1082, %v1090
    %v1093 = vmul.f32 %v1085, %v1091
    %v1094 = vadd.f32 %v1000, %v1092
    %v1095 = vadd.f32 %v1001, %v1093
    %v1096 = vld [vmem:[%s5] sm:$0x1]
    %v1098 = vlaneseq
    %v1099 = vshrl.u32 %v1098, 7
    %v1100 = vsub.s32 0, %v1099
    %v1101 = vrot.slane %v1096, %v1100
    %v1103 = vadd.f32 %v1094, %v1101
    %v1104 = vadd.f32 %v1095, %v1101
    %v1105 = vmax.f32 %v1103, 0.0
    %v1106 = vmax.f32 %v1104, 0.0
    %v1107 = vld [vmem:[%s6] sm:$0xff]
    %v1108 = vld [vmem:[%s6 + $0x8] sm:$0xff]
    %v1109 = vld [vmem:[%s6 + $0x10] sm:$0xff]
    %v1110 = vld [vmem:[%s6 + $0x18] sm:$0xff]
    %v1112 = vsel %vm597, %v1105, 0
    %v1115 = vsel %vm597, %v1106, 0
    %1117 = vmatprep.subr.mxu0 0.0
    %1118 = vmatpush1.msra.mxu0 0.0
    %1119 = vmatprep.subr.mxu0 0.0
    %1120 = vmatpush1.msra.mxu0 0.0
    %1121 = vmatprep.subr.mxu0 0.0
    %1122 = vmatpush1.msra.mxu0 0.0
    %1123 = vmatprep.subr.mxu0 0.0
    %1124 = vmatpush1.msra.mxu0 0.0
    %1125 = vmatprep.subr.mxu0 0.0
    %1126 = vmatpush1.msra.mxu0 0.0
    %1127 = vmatprep.subr.mxu0 0.0
    %1128 = vmatpush1.msra.mxu0 0.0
    %1129 = vmatprep.subr.mxu0 0.0
    %1130 = vmatpush1.msra.mxu0 0.0
    %1131 = vmatprep.subr.mxu0 0.0
    %1132 = vmatpush1.msra.mxu0 0.0
    %1133 = vmatprep.subr.mxu0 0.0
    %1134 = vmatpush1.msra.mxu0 0.0
    %1135 = vmatprep.subr.mxu0 0.0
    %1136 = vmatpush1.msra.mxu0 0.0
    %1137 = vmatprep.subr.mxu0 0.0
    %1138 = vmatpush1.msra.mxu0 0.0
    %1139 = vmatprep.subr.mxu0 0.0
    %1140 = vmatpush1.msra.mxu0 0.0
    %1141 = vmatprep.subr.mxu0 0.0
    %1142 = vmatpush1.msra.mxu0 %v1110
    %1143 = vmatprep.subr.mxu0 0.0
    %1144 = vmatpush1.msra.mxu0 %v1109
    %1145 = vmatprep.subr.mxu0 0.0
    %1146 = vmatpush1.msra.mxu0 %v1108
    %1147 = vmatprep.subr.mxu0 0.0
    %1148 = vmatpush1.msra.mxu0 %v1107
    %1149 = vmatprep.subr.mxu0 0.0
    %1150 = vmatpush2.msra.mxu0 0.0
    %1151 = vmatprep.subr.mxu0 0.0
    %1152 = vmatpush2.msra.mxu0 0.0
    %1153 = vmatprep.subr.mxu0 0.0
    %1154 = vmatpush2.msra.mxu0 0.0
    %1155 = vmatprep.subr.mxu0 0.0
    %1156 = vmatpush2.msra.mxu0 0.0
    %1157 = vmatprep.subr.mxu0 0.0
    %1158 = vmatpush2.msra.mxu0 0.0
    %1159 = vmatprep.subr.mxu0 0.0
    %1160 = vmatpush2.msra.mxu0 0.0
    %1161 = vmatprep.subr.mxu0 0.0
    %1162 = vmatpush2.msra.mxu0 0.0
    %1163 = vmatprep.subr.mxu0 0.0
    %1164 = vmatpush2.msra.mxu0 0.0
    %1165 = vmatprep.subr.mxu0 0.0
    %1166 = vmatpush2.msra.mxu0 0.0
    %1167 = vmatprep.subr.mxu0 0.0
    %1168 = vmatpush2.msra.mxu0 0.0
    %1169 = vmatprep.subr.mxu0 0.0
    %1170 = vmatpush2.msra.mxu0 0.0
    %1171 = vmatprep.subr.mxu0 0.0
    %1172 = vmatpush2.msra.mxu0 0.0
    %1173 = vmatprep.subr.mxu0 0.0
    %1174 = vmatpush2.msra.mxu0 0.0
    %1175 = vmatprep.subr.mxu0 0.0
    %1176 = vmatpush2.msra.mxu0 0.0
    %1177 = vmatprep.subr.mxu0 0.0
    %1178 = vmatpush2.msra.mxu0 0.0
    %1179 = vmatprep.subr.mxu0 0.0
    %1180 = vmatpush2.msra.mxu0 0.0
    %1181 = vmatprep.mubr.f32.mxu0 0.0
    %1182 = vmatmul.mubr.f32.gmra.mxu0 %v1112
    %v1183 = vpop.f32.mrf.mxu0
    %v1184 = vadd.f32 0.0, %v1183
    %v1185 = vpop.f32.mrf.mxu0
    %1186 = vmatprep.mubr.f32.mxu0 0.0
    %1187 = vmatmul.mubr.f32.gmra.mxu0 %v1115
    %v1188 = vpop.f32.mrf.mxu0
    %v1189 = vadd.f32 0.0, %v1188
    %v1190 = vpop.f32.mrf.mxu0
    %1191 = vdwg.mxu0
    %v1192 = vpack.c.bf16 %v1189, %v1184
    %1195 = vrot.lane.b32.xlu0 %v1184, 60
    %v1196 = vpop.permute.xlu0 %1195
    %1197 = vrot.lane.b32.xlu0 %v1189, 60
    %v1198 = vpop.permute.xlu0 %1197
    %1201 = vxpose.xlu0.b32.start [1/16] %v1196, 128
    %1202 = vxpose.xlu0.b32.cont [2/16] %v1198, 128
    %1203 = vxpose.xlu0.b32.cont [3/16] 0.0, 128
    %1204 = vxpose.xlu0.b32.cont [4/16] 0.0, 128
    %1205 = vxpose.xlu0.b32.cont [5/16] 0.0, 128
    %1206 = vxpose.xlu0.b32.cont [6/16] 0.0, 128
    %1207 = vxpose.xlu0.b32.cont [7/16] 0.0, 128
    %1208 = vxpose.xlu0.b32.cont [8/16] 0.0, 128
    %1209 = vxpose.xlu0.b32.cont [9/16] 0.0, 128
    %1210 = vxpose.xlu0.b32.cont [10/16] 0.0, 128
    %1211 = vxpose.xlu0.b32.cont [11/16] 0.0, 128
    %1212 = vxpose.xlu0.b32.cont [12/16] 0.0, 128
    %1213 = vxpose.xlu0.b32.cont [13/16] 0.0, 128
    %1214 = vxpose.xlu0.b32.cont [14/16] 0.0, 128
    %1215 = vxpose.xlu0.b32.cont [15/16] 0.0, 128
    %1216 = vxpose.xlu0.b32.end [16/16] 0.0, 128
    %v1217 = vpop.trf.xlu0
    %v1218 = vpop.trf.xlu0
    %v1219 = vpop.trf.xlu0
    %v1220 = vpop.trf.xlu0
    %v1221 = vpop.trf.xlu0
    %v1222 = vpop.trf.xlu0
    %v1223 = vpop.trf.xlu0
    %v1224 = vpop.trf.xlu0
    %v1225 = vpop.trf.xlu0
    %v1226 = vpop.trf.xlu0
    %v1227 = vpop.trf.xlu0
    %v1228 = vpop.trf.xlu0
    %v1229 = vpop.trf.xlu0
    %v1230 = vpop.trf.xlu0
    %v1231 = vpop.trf.xlu0
    %v1232 = vpop.trf.xlu0
    %1233 = vset.pattern.permute.xlu0 64
    %1234 = vperm.xlu0 %1233, %v1184
    %v1235 = vpop.permute.xlu0 %1234
    %1237 = vset.pattern.permute.xlu0 64
    %1238 = vperm.xlu0 %1237, %v1189
    %v1239 = vpop.permute.xlu0 %1238
    %v1241 = vlaneseq
    %v1242 = vshrl.u32 %v1241, 7
    %v1243 = vsub.s32 0, %v1242
    %v1244 = vrot.slane %v1217, %v1243
    %v1245 = vadd.f32 %v1235, %v1244
    %v1246 = vadd.f32 %v1239, %v1244
    %v1247 = vmul.f32 %v1245, 0.2
    %v1248 = vmul.f32 %v1246, 0.2
    %v1249 = vmax.f32 %v1245, %v1247
    %v1250 = vmax.f32 %v1246, %v1248
    %v1251 = vadd.f32 %v1249, %v74
    %v1252 = vadd.f32 %v1250, %v75
    %v1253 = vsel %vm223, %v1251, -inf
    %1254 = vmax.xlane.f32.xlu0 %v1253
    %v1255 = vpop.xlane.xlu0 %1254
    %v1256 = vsel %vm223, %v1252, -inf
    %1257 = vmax.xlane.f32.xlu0 %v1256
    %v1258 = vpop.xlane.xlu0 %1257
    %v1259 = vsub.f32 %v1251, %v1255
    %v1260 = vsub.f32 %v1252, %v1258
    %v1261 = vmul.f32 %v1259, 1.442695
    %v1262 = vpow.pop %v1261
    %v1263 = vmul.f32 %v1260, 1.442695
    %v1264 = vpow.pop %v1263
    %v1265 = vsel %vm223, %v1262, 0.0
    %1266 = vadd.xlane.f32.xlu0 %v1265
    %v1267 = vpop.xlane.xlu0 %1266
    %v1268 = vsel %vm223, %v1264, 0.0
    %1269 = vadd.xlane.f32.xlu0 %v1268
    %v1270 = vpop.xlane.xlu0 %1269
    %v1271 = vpack.c.bf16 %v1264, %v1262
    %v1273 = vsel %vm223, %v1271, 0
    %1275 = vmatprep.subr.bf16.mxu0 0
    %1276 = vmatpush1.bf16.msra.mxu0 0
    %1277 = vmatprep.subr.bf16.mxu0 0
    %1278 = vmatpush1.bf16.msra.mxu0 0
    %1279 = vmatprep.subr.bf16.mxu0 0
    %1280 = vmatpush1.bf16.msra.mxu0 0
    %1281 = vmatprep.subr.bf16.mxu0 0
    %1282 = vmatpush1.bf16.msra.mxu0 0
    %1283 = vmatprep.subr.bf16.mxu0 0
    %1284 = vmatpush1.bf16.msra.mxu0 0
    %1285 = vmatprep.subr.bf16.mxu0 0
    %1286 = vmatpush1.bf16.msra.mxu0 0
    %1287 = vmatprep.subr.bf16.mxu0 0
    %1288 = vmatpush1.bf16.msra.mxu0 0
    %1289 = vmatprep.subr.bf16.mxu0 0
    %1290 = vmatpush1.bf16.msra.mxu0 %v1192
    %1291 = vmatprep.subr.bf16.mxu0 0
    %1292 = vmatpush2.bf16.msra.mxu0 0
    %1293 = vmatprep.subr.bf16.mxu0 0
    %1294 = vmatpush2.bf16.msra.mxu0 0
    %1295 = vmatprep.subr.bf16.mxu0 0
    %1296 = vmatpush2.bf16.msra.mxu0 0
    %1297 = vmatprep.subr.bf16.mxu0 0
    %1298 = vmatpush2.bf16.msra.mxu0 0
    %1299 = vmatprep.subr.bf16.mxu0 0
    %1300 = vmatpush2.bf16.msra.mxu0 0
    %1301 = vmatprep.subr.bf16.mxu0 0
    %1302 = vmatpush2.bf16.msra.mxu0 0
    %1303 = vmatprep.subr.bf16.mxu0 0
    %1304 = vmatpush2.bf16.msra.mxu0 0
    %1305 = vmatprep.subr.bf16.mxu0 0
    %1306 = vmatpush2.bf16.msra.mxu0 0
    %1307 = vmatprep.mubr.bf16.mxu0 0
    %1308 = vmatmul.mubr.bf16.gmra.mxu0 %v1273
    %v1309 = vpop.f32.mrf.mxu0
    %v1310 = vadd.f32 0.0, %v1309
    %v1311 = vpop.f32.mrf.mxu0
    %v1312 = vpop.f32.mrf.mxu0
    %v1313 = vadd.f32 0.0, %v1312
    %v1314 = vpop.f32.mrf.mxu0
    %1315 = vdwg.mxu0
    %v1316 = vrcp.pop %v1267
    %v1317 = vrcp.pop %v1270
    %v1318 = vmul.f32 %v1316, 0.25
    %v1319 = vmul.f32 %v1317, 0.25
    %v1320 = vmul.f32 %v1310, %v1318
    %v1321 = vmul.f32 %v1313, %v1319
    %v1322 = vadd.f32 %v1320, 0.0
    %v1323 = vadd.f32 %v1321, 0.0
    %1324 = vset.pattern.permute.xlu0 65
    %1325 = vperm.xlu0 %1324, %v1184
    %v1326 = vpop.permute.xlu0 %1325
    %1328 = vset.pattern.permute.xlu0 65
    %1329 = vperm.xlu0 %1328, %v1189
    %v1330 = vpop.permute.xlu0 %1329
    %v1332 = vlaneseq
    %v1333 = vshrl.u32 %v1332, 7
    %v1334 = vsub.s32 1, %v1333
    %v1335 = vrot.slane %v1217, %v1334
    %v1336 = vadd.f32 %v1326, %v1335
    %v1337 = vadd.f32 %v1330, %v1335
    %v1338 = vmul.f32 %v1336, 0.2
    %v1339 = vmul.f32 %v1337, 0.2
    %v1340 = vmax.f32 %v1336, %v1338
    %v1341 = vmax.f32 %v1337, %v1339
    %v1342 = vadd.f32 %v1340, %v74
    %v1343 = vadd.f32 %v1341, %v75
    %v1344 = vsel %vm223, %v1342, -inf
    %1345 = vmax.xlane.f32.xlu0 %v1344
    %v1346 = vpop.xlane.xlu0 %1345
    %v1347 = vsel %vm223, %v1343, -inf
    %1348 = vmax.xlane.f32.xlu0 %v1347
    %v1349 = vpop.xlane.xlu0 %1348
    %v1350 = vsub.f32 %v1342, %v1346
    %v1351 = vsub.f32 %v1343, %v1349
    %v1352 = vmul.f32 %v1350, 1.442695
    %v1353 = vpow.pop %v1352
    %v1354 = vmul.f32 %v1351, 1.442695
    %v1355 = vpow.pop %v1354
    %v1356 = vsel %vm223, %v1353, 0.0
    %1357 = vadd.xlane.f32.xlu0 %v1356
    %v1358 = vpop.xlane.xlu0 %1357
    %v1359 = vsel %vm223, %v1355, 0.0
    %1360 = vadd.xlane.f32.xlu0 %v1359
    %v1361 = vpop.xlane.xlu0 %1360
    %v1362 = vpack.c.bf16 %v1355, %v1353
    %1364 = vrot.lane.b32.xlu0 %v1192, 112
    %v1365 = vpop.permute.xlu0 %1364
    %v1368 = vsel %vm223, %v1362, 0
    %1370 = vmatprep.subr.bf16.mxu0 0
    %1371 = vmatpush1.bf16.msra.mxu0 0
    %1372 = vmatprep.subr.bf16.mxu0 0
    %1373 = vmatpush1.bf16.msra.mxu0 0
    %1374 = vmatprep.subr.bf16.mxu0 0
    %1375 = vmatpush1.bf16.msra.mxu0 0
    %1376 = vmatprep.subr.bf16.mxu0 0
    %1377 = vmatpush1.bf16.msra.mxu0 0
    %1378 = vmatprep.subr.bf16.mxu0 0
    %1379 = vmatpush1.bf16.msra.mxu0 0
    %1380 = vmatprep.subr.bf16.mxu0 0
    %1381 = vmatpush1.bf16.msra.mxu0 0
    %1382 = vmatprep.subr.bf16.mxu0 0
    %1383 = vmatpush1.bf16.msra.mxu0 0
    %1384 = vmatprep.subr.bf16.mxu0 0
    %1385 = vmatpush1.bf16.msra.mxu0 %v1365
    %1386 = vmatprep.subr.bf16.mxu0 0
    %1387 = vmatpush2.bf16.msra.mxu0 0
    %1388 = vmatprep.subr.bf16.mxu0 0
    %1389 = vmatpush2.bf16.msra.mxu0 0
    %1390 = vmatprep.subr.bf16.mxu0 0
    %1391 = vmatpush2.bf16.msra.mxu0 0
    %1392 = vmatprep.subr.bf16.mxu0 0
    %1393 = vmatpush2.bf16.msra.mxu0 0
    %1394 = vmatprep.subr.bf16.mxu0 0
    %1395 = vmatpush2.bf16.msra.mxu0 0
    %1396 = vmatprep.subr.bf16.mxu0 0
    %1397 = vmatpush2.bf16.msra.mxu0 0
    %1398 = vmatprep.subr.bf16.mxu0 0
    %1399 = vmatpush2.bf16.msra.mxu0 0
    %1400 = vmatprep.subr.bf16.mxu0 0
    %1401 = vmatpush2.bf16.msra.mxu0 0
    %1402 = vmatprep.mubr.bf16.mxu0 0
    %1403 = vmatmul.mubr.bf16.gmra.mxu0 %v1368
    %v1404 = vpop.f32.mrf.mxu0
    %v1405 = vadd.f32 0.0, %v1404
    %v1406 = vpop.f32.mrf.mxu0
    %v1407 = vpop.f32.mrf.mxu0
    %v1408 = vadd.f32 0.0, %v1407
    %v1409 = vpop.f32.mrf.mxu0
    %1410 = vdwg.mxu0
    %v1411 = vrcp.pop %v1358
    %v1412 = vrcp.pop %v1361
    %v1413 = vmul.f32 %v1411, 0.25
    %v1414 = vmul.f32 %v1412, 0.25
    %v1415 = vmul.f32 %v1405, %v1413
    %v1416 = vmul.f32 %v1408, %v1414
    %v1417 = vadd.f32 %v1322, %v1415
    %v1418 = vadd.f32 %v1323, %v1416
    %1419 = vset.pattern.permute.xlu0 66
    %1420 = vperm.xlu0 %1419, %v1184
    %v1421 = vpop.permute.xlu0 %1420
    %1423 = vset.pattern.permute.xlu0 66
    %1424 = vperm.xlu0 %1423, %v1189
    %v1425 = vpop.permute.xlu0 %1424
    %v1427 = vlaneseq
    %v1428 = vshrl.u32 %v1427, 7
    %v1429 = vsub.s32 2, %v1428
    %v1430 = vrot.slane %v1217, %v1429
    %v1431 = vadd.f32 %v1421, %v1430
    %v1432 = vadd.f32 %v1425, %v1430
    %v1433 = vmul.f32 %v1431, 0.2
    %v1434 = vmul.f32 %v1432, 0.2
    %v1435 = vmax.f32 %v1431, %v1433
    %v1436 = vmax.f32 %v1432, %v1434
    %v1437 = vadd.f32 %v1435, %v74
    %v1438 = vadd.f32 %v1436, %v75
    %v1439 = vsel %vm223, %v1437, -inf
    %1440 = vmax.xlane.f32.xlu0 %v1439
    %v1441 = vpop.xlane.xlu0 %1440
    %v1442 = vsel %vm223, %v1438, -inf
    %1443 = vmax.xlane.f32.xlu0 %v1442
    %v1444 = vpop.xlane.xlu0 %1443
    %v1445 = vsub.f32 %v1437, %v1441
    %v1446 = vsub.f32 %v1438, %v1444
    %v1447 = vmul.f32 %v1445, 1.442695
    %v1448 = vpow.pop %v1447
    %v1449 = vmul.f32 %v1446, 1.442695
    %v1450 = vpow.pop %v1449
    %v1451 = vsel %vm223, %v1448, 0.0
    %1452 = vadd.xlane.f32.xlu0 %v1451
    %v1453 = vpop.xlane.xlu0 %1452
    %v1454 = vsel %vm223, %v1450, 0.0
    %1455 = vadd.xlane.f32.xlu0 %v1454
    %v1456 = vpop.xlane.xlu0 %1455
    %v1457 = vpack.c.bf16 %v1450, %v1448
    %1458 = vrot.lane.b32.xlu0 %v1192, 96
    %v1459 = vpop.permute.xlu0 %1458
    %v1462 = vsel %vm223, %v1457, 0
    %1464 = vmatprep.subr.bf16.mxu0 0
    %1465 = vmatpush1.bf16.msra.mxu0 0
    %1466 = vmatprep.subr.bf16.mxu0 0
    %1467 = vmatpush1.bf16.msra.mxu0 0
    %1468 = vmatprep.subr.bf16.mxu0 0
    %1469 = vmatpush1.bf16.msra.mxu0 0
    %1470 = vmatprep.subr.bf16.mxu0 0
    %1471 = vmatpush1.bf16.msra.mxu0 0
    %1472 = vmatprep.subr.bf16.mxu0 0
    %1473 = vmatpush1.bf16.msra.mxu0 0
    %1474 = vmatprep.subr.bf16.mxu0 0
    %1475 = vmatpush1.bf16.msra.mxu0 0
    %1476 = vmatprep.subr.bf16.mxu0 0
    %1477 = vmatpush1.bf16.msra.mxu0 0
    %1478 = vmatprep.subr.bf16.mxu0 0
    %1479 = vmatpush1.bf16.msra.mxu0 %v1459
    %1480 = vmatprep.subr.bf16.mxu0 0
    %1481 = vmatpush2.bf16.msra.mxu0 0
    %1482 = vmatprep.subr.bf16.mxu0 0
    %1483 = vmatpush2.bf16.msra.mxu0 0
    %1484 = vmatprep.subr.bf16.mxu0 0
    %1485 = vmatpush2.bf16.msra.mxu0 0
    %1486 = vmatprep.subr.bf16.mxu0 0
    %1487 = vmatpush2.bf16.msra.mxu0 0
    %1488 = vmatprep.subr.bf16.mxu0 0
    %1489 = vmatpush2.bf16.msra.mxu0 0
    %1490 = vmatprep.subr.bf16.mxu0 0
    %1491 = vmatpush2.bf16.msra.mxu0 0
    %1492 = vmatprep.subr.bf16.mxu0 0
    %1493 = vmatpush2.bf16.msra.mxu0 0
    %1494 = vmatprep.subr.bf16.mxu0 0
    %1495 = vmatpush2.bf16.msra.mxu0 0
    %1496 = vmatprep.mubr.bf16.mxu0 0
    %1497 = vmatmul.mubr.bf16.gmra.mxu0 %v1462
    %v1498 = vpop.f32.mrf.mxu0
    %v1499 = vadd.f32 0.0, %v1498
    %v1500 = vpop.f32.mrf.mxu0
    %v1501 = vpop.f32.mrf.mxu0
    %v1502 = vadd.f32 0.0, %v1501
    %v1503 = vpop.f32.mrf.mxu0
    %1504 = vdwg.mxu0
    %v1505 = vrcp.pop %v1453
    %v1506 = vrcp.pop %v1456
    %v1507 = vmul.f32 %v1505, 0.25
    %v1508 = vmul.f32 %v1506, 0.25
    %v1509 = vmul.f32 %v1499, %v1507
    %v1510 = vmul.f32 %v1502, %v1508
    %v1511 = vadd.f32 %v1417, %v1509
    %v1512 = vadd.f32 %v1418, %v1510
    %1513 = vset.pattern.permute.xlu0 67
    %1514 = vperm.xlu0 %1513, %v1184
    %v1515 = vpop.permute.xlu0 %1514
    %1517 = vset.pattern.permute.xlu0 67
    %1518 = vperm.xlu0 %1517, %v1189
    %v1519 = vpop.permute.xlu0 %1518
    %v1521 = vlaneseq
    %v1522 = vshrl.u32 %v1521, 7
    %v1523 = vsub.s32 3, %v1522
    %v1524 = vrot.slane %v1217, %v1523
    %v1525 = vadd.f32 %v1515, %v1524
    %v1526 = vadd.f32 %v1519, %v1524
    %v1527 = vmul.f32 %v1525, 0.2
    %v1528 = vmul.f32 %v1526, 0.2
    %v1529 = vmax.f32 %v1525, %v1527
    %v1530 = vmax.f32 %v1526, %v1528
    %v1531 = vadd.f32 %v1529, %v74
    %v1532 = vadd.f32 %v1530, %v75
    %v1533 = vsel %vm223, %v1531, -inf
    %1534 = vmax.xlane.f32.xlu0 %v1533
    %v1535 = vpop.xlane.xlu0 %1534
    %v1536 = vsel %vm223, %v1532, -inf
    %1537 = vmax.xlane.f32.xlu0 %v1536
    %v1538 = vpop.xlane.xlu0 %1537
    %v1539 = vsub.f32 %v1531, %v1535
    %v1540 = vsub.f32 %v1532, %v1538
    %v1541 = vmul.f32 %v1539, 1.442695
    %v1542 = vpow.pop %v1541
    %v1543 = vmul.f32 %v1540, 1.442695
    %v1544 = vpow.pop %v1543
    %v1545 = vsel %vm223, %v1542, 0.0
    %1546 = vadd.xlane.f32.xlu0 %v1545
    %v1547 = vpop.xlane.xlu0 %1546
    %v1548 = vsel %vm223, %v1544, 0.0
    %1549 = vadd.xlane.f32.xlu0 %v1548
    %v1550 = vpop.xlane.xlu0 %1549
    %v1551 = vpack.c.bf16 %v1544, %v1542
    %1552 = vrot.lane.b32.xlu0 %v1192, 80
    %v1553 = vpop.permute.xlu0 %1552
    %v1556 = vsel %vm223, %v1551, 0
    %1558 = vmatprep.subr.bf16.mxu0 0
    %1559 = vmatpush1.bf16.msra.mxu0 0
    %1560 = vmatprep.subr.bf16.mxu0 0
    %1561 = vmatpush1.bf16.msra.mxu0 0
    %1562 = vmatprep.subr.bf16.mxu0 0
    %1563 = vmatpush1.bf16.msra.mxu0 0
    %1564 = vmatprep.subr.bf16.mxu0 0
    %1565 = vmatpush1.bf16.msra.mxu0 0
    %1566 = vmatprep.subr.bf16.mxu0 0
    %1567 = vmatpush1.bf16.msra.mxu0 0
    %1568 = vmatprep.subr.bf16.mxu0 0
    %1569 = vmatpush1.bf16.msra.mxu0 0
    %1570 = vmatprep.subr.bf16.mxu0 0
    %1571 = vmatpush1.bf16.msra.mxu0 0
    %1572 = vmatprep.subr.bf16.mxu0 0
    %1573 = vmatpush1.bf16.msra.mxu0 %v1553
    %1574 = vmatprep.subr.bf16.mxu0 0
    %1575 = vmatpush2.bf16.msra.mxu0 0
    %1576 = vmatprep.subr.bf16.mxu0 0
    %1577 = vmatpush2.bf16.msra.mxu0 0
    %1578 = vmatprep.subr.bf16.mxu0 0
    %1579 = vmatpush2.bf16.msra.mxu0 0
    %1580 = vmatprep.subr.bf16.mxu0 0
    %1581 = vmatpush2.bf16.msra.mxu0 0
    %1582 = vmatprep.subr.bf16.mxu0 0
    %1583 = vmatpush2.bf16.msra.mxu0 0
    %1584 = vmatprep.subr.bf16.mxu0 0
    %1585 = vmatpush2.bf16.msra.mxu0 0
    %1586 = vmatprep.subr.bf16.mxu0 0
    %1587 = vmatpush2.bf16.msra.mxu0 0
    %1588 = vmatprep.subr.bf16.mxu0 0
    %1589 = vmatpush2.bf16.msra.mxu0 0
    %1590 = vmatprep.mubr.bf16.mxu0 0
    %1591 = vmatmul.mubr.bf16.gmra.mxu0 %v1556
    %v1592 = vpop.f32.mrf.mxu0
    %v1593 = vadd.f32 0.0, %v1592
    %v1594 = vpop.f32.mrf.mxu0
    %v1595 = vpop.f32.mrf.mxu0
    %v1596 = vadd.f32 0.0, %v1595
    %v1597 = vpop.f32.mrf.mxu0
    %1598 = vdwg.mxu0
    %v1599 = vrcp.pop %v1547
    %v1600 = vrcp.pop %v1550
    %v1601 = vmul.f32 %v1599, 0.25
    %v1602 = vmul.f32 %v1600, 0.25
    %v1603 = vmul.f32 %v1593, %v1601
    %v1604 = vmul.f32 %v1596, %v1602
    %v1605 = vadd.f32 %v1511, %v1603
    %v1606 = vadd.f32 %v1512, %v1604
    %v1607 = vld [vmem:[%s7] sm:$0x1]
    %v1609 = vlaneseq
    %v1610 = vshrl.u32 %v1609, 7
    %v1611 = vsub.s32 0, %v1610
    %v1612 = vrot.slane %v1607, %v1611
    %v1614 = vadd.f32 %v1605, %v1612
    %v1615 = vadd.f32 %v1606, %v1612
    %v1616 = vmax.f32 %v1614, 0.0
    %v1617 = vmax.f32 %v1615, 0.0
    %v1618 = vsel %vm223, %v1616, 0.0
    %v1619 = vsel %vm223, %v1617, 0.0
    %1620 = vst [vmem:[#allocation8] sm:$0xff] %v1618
    %1621 = vst [vmem:[#allocation8 + $0x8] sm:$0xff] %v1619
    // Predicated region
    $region46: #{tpu_custom_call.1} parent=1 // pred_check
      _
    $region47: #{tpu_custom_call.1} parent=1 // pred_check_branch
      %1623 = sbr.rel (0) target = $region49
    $region48: #{tpu_custom_call.1} parent=1 // pred_region
      %s1625 = ssub.s32 256, 256
      %1626 = vsyncadd [#allocation4], %s1625
      %s1627 = sshll.u32 [#allocation8], 4
      %s1628 = int_to_ptr.vmem [resolvable:$true] %s1627
      %1633 = dma.vmem_to_hbm [thread:$0]  %s1628, 256, %s8, [#allocation4], 128, 128, 8
    $region49: #{tpu_custom_call.1} parent=1 // pred_fallthru
      _
    // Predicated region
    $region50: #{tpu_custom_call.1} parent=1 // pred_check
      _
    $region51: #{tpu_custom_call.1} parent=1 // pred_check_branch
      %1635 = sbr.rel (0) target = $region53
    $region52: #{tpu_custom_call.1} parent=1 // pred_region
      %1636 = dma.done [#allocation4], 256
    $region53: #{tpu_custom_call.1} parent=1 // pred_fallthru
      _
    %1637 = vsyncpa [#allocation3], 1
    %1638 = vsyncpa [#allocation6], 1
    %1639 = vsyncpa [#allocation4], 1

</llo_original>
